<compile_context>
chip_gen: v7x
topology: tpu7x:2x2x1
jax: 0.10.0
libtpu: 0.0.40
codegen_flags: <defaults>
</compile_context>

<pallas_src>
import functools
import math

import jax
import jax.numpy as jnp
from jax.experimental import pallas as pl
from jax.experimental.pallas import tpu as pltpu


def _silu(z):
    # exact sigmoid via exp (EUP); exact divide keeps us inside the 1e-4 tolerance
    return z * (1.0 / (1.0 + jnp.exp(-z)))


# ----------------------------------------------------------------------------
# Kernel: full SPP forward for one grid step.  Activations are (C, L) with
# L = G*H*W lanes (G images folded side-by-side on the lane axis).
# ----------------------------------------------------------------------------
def spp_kernel(x_ref, w1_ref, b1_ref, w20_ref, w21_ref, w22_ref, w23_ref,
               b2_ref, o_ref, *, H, W):
    L = x_ref.shape[-1]                                       # G * H * W
    x = x_ref[0].astype(jnp.float32)                          # (C1, L)
    c_ = w1_ref.shape[0]

    # ---- cv1: folded 1x1 conv + BN, then SiLU ------------------------------
    h = jnp.dot(w1_ref[...], x, preferred_element_type=jnp.float32)
    h = _silu(h + b1_ref[...])                                # (c_, L)

    # ---- geometry + hoisted validity masks (computed once, reused 3x) ------
    lane = jax.lax.broadcasted_iota(jnp.int32, (c_, L), 1)
    if (W & (W - 1)) == 0 and (H & (H - 1)) == 0:             # power-of-two fast path
        col = jnp.bitwise_and(lane, W - 1)
        row = jnp.bitwise_and(jnp.right_shift(lane, int(math.log2(W))), H - 1)
    else:
        col = lane % W
        row = (lane // W) % H                                 # row WITHIN image

    offsets = (-2, -1, 1, 2)
    col_masks = [jnp.logical_and(col + d >= 0, col + d < W) for d in offsets]
    row_masks = [jnp.logical_and(row + d >= 0, row + d < H) for d in offsets]

    def lroll(a, d):
        # out[:, i] = a[:, (i + d) % L]   (wrapped lanes are masked by caller)
        return pltpu.roll(a, shift=(-d) % L, axis=1)          # XLU vrot

    def pool5(a):
        # 5x5 max pool, stride 1, pad 2 (implicit -inf padding), separable.
        m = a
        for d, msk in zip(offsets, col_masks):                # along W (lane offsets)
            m = jnp.where(msk, jnp.maximum(m, lroll(a, d)), m)
        r = m
        for d, msk in zip(offsets, row_masks):                # along H (offsets of W lanes)
            r = jnp.where(msk, jnp.maximum(r, lroll(m, d * W)), r)
        return r

    m5 = pool5(h)
    m9 = pool5(m5)            # == 9x9 max pool of h
    m13 = pool5(m9)           # == 13x13 max pool of h

    # ---- cv2: folded 1x1 conv + BN on the channel concat, then SiLU --------
    # Concat eliminated: cv2 weight is pre-split into its four (c2, c_) blocks,
    # y accumulates four matmuls in f32 (no sublane repack of a 4-row concat).
    y = jnp.dot(w20_ref[...], h, preferred_element_type=jnp.float32)
    y = y + jnp.dot(w21_ref[...], m5, preferred_element_type=jnp.float32)
    y = y + jnp.dot(w22_ref[...], m9, preferred_element_type=jnp.float32)
    y = y + jnp.dot(w23_ref[...], m13, preferred_element_type=jnp.float32)
    y = _silu(y + b2_ref[...])                                # (c2, L)
    o_ref[0] = y.astype(o_ref.dtype)


# ----------------------------------------------------------------------------
# Wrapper
# ----------------------------------------------------------------------------
def _fold_conv_bn(w, gamma, beta, mean, var, eps):
    # w: (Cout, Cin) weights of a bias-free 1x1 conv. Returns (W_folded, b_folded).
    scale = gamma / jnp.sqrt(var + eps)                       # (Cout,)
    return w * scale[:, None], (beta - mean * scale)[:, None]


def _num_tensorcores():
    # v7x exposes 2 TensorCores per chip/device; v5e/v6e have 1.
    try:
        kind = jax.devices()[0].device_kind.lower()
    except Exception:
        return 1
    return 2 if "v7" in kind else 1


def spp_forward(x, params, eps=1e-5):
    """x: (N, C1, H, W) float32. Returns (N, C2, H, W)."""
    N, C1, H, W = x.shape
    HW = H * W
    c_ = params["cv1_w"].shape[0]
    c2 = params["cv2_w"].shape[0]

    # Host-side BN folding (free at trace time; eval-mode BN).
    w1, b1 = _fold_conv_bn(params["cv1_w"], params["cv1_g"], params["cv1_b"],
                           params["cv1_m"], params["cv1_v"], eps)
    w2, b2 = _fold_conv_bn(params["cv2_w"], params["cv2_g"], params["cv2_b"],
                           params["cv2_m"], params["cv2_v"], eps)
    # Split cv2 weight into the four blocks that would have multiplied the concat.
    w2_blocks = [w2[:, i * c_:(i + 1) * c_] for i in range(4)]

    # Generation-aware grid: one image per TC on multi-core chips (v7x),
    # whole batch folded onto lanes in a single step on single-TC chips.
    steps = min(_num_tensorcores(), N)
    if N % steps != 0:
        steps = N                                             # safe fallback: 1 image/step
    G = N // steps                                            # images per grid step

    # (N, C1, H, W) -> (steps, C1, G*HW): G images side-by-side on the lane axis.
    x_folded = (x.reshape(steps, G, C1, HW)
                  .transpose(0, 2, 1, 3)
                  .reshape(steps, C1, G * HW))

    out = pl.pallas_call(
        functools.partial(spp_kernel, H=H, W=W),
        out_shape=jax.ShapeDtypeStruct((steps, c2, G * HW), x.dtype),
        grid=(steps,),
        in_specs=[
            pl.BlockSpec((1, C1, G * HW), lambda b: (b, 0, 0)),  # x (G images)
            pl.BlockSpec((c_, C1), lambda b: (0, 0)),            # cv1 weight (BN-folded)
            pl.BlockSpec((c_, 1), lambda b: (0, 0)),             # cv1 bias   (BN-folded)
            pl.BlockSpec((c2, c_), lambda b: (0, 0)),            # cv2 weight block 0 (h)
            pl.BlockSpec((c2, c_), lambda b: (0, 0)),            # cv2 weight block 1 (mp5)
            pl.BlockSpec((c2, c_), lambda b: (0, 0)),            # cv2 weight block 2 (mp9)
            pl.BlockSpec((c2, c_), lambda b: (0, 0)),            # cv2 weight block 3 (mp13)
            pl.BlockSpec((c2, 1), lambda b: (0, 0)),             # cv2 bias   (BN-folded)
        ],
        out_specs=pl.BlockSpec((1, c2, G * HW), lambda b: (b, 0, 0)),
        compiler_params=pltpu.CompilerParams(
            dimension_semantics=("parallel",)),
    )(x_folded, w1, b1, *w2_blocks, b2)

    return (out.reshape(steps, c2, G, HW)
               .transpose(0, 2, 1, 3)
               .reshape(N, c2, H, W))


# ----------------------------------------------------------------------------
# Pure-JAX reference (eval-mode BN, -inf-padded max pools)
# ----------------------------------------------------------------------------
def reference_spp(x, params, eps=1e-5):
    hp = jax.lax.Precision.HIGHEST

    def conv_bn_silu(z, w, g, b, m, v):
        y = jnp.einsum("oc,nchw->nohw", w, z, precision=hp)
        y = (y - m[None, :, None, None]) * (
            g[None, :, None, None] / jnp.sqrt(v[None, :, None, None] + eps)
        ) + b[None, :, None, None]
        return y * jax.nn.sigmoid(y)

    h = conv_bn_silu(x, params["cv1_w"], params["cv1_g"], params["cv1_b"],
                     params["cv1_m"], params["cv1_v"])
    pools = []
    for k in (5, 9, 13):
        p = k // 2
        pools.append(jax.lax.reduce_window(
            h, -jnp.inf, jax.lax.max,
            window_dimensions=(1, 1, k, k),
            window_strides=(1, 1, 1, 1),
            padding=((0, 0), (0, 0), (p, p), (p, p))))
    cat = jnp.concatenate([h] + pools, axis=1)
    return conv_bn_silu(cat, params["cv2_w"], params["cv2_g"], params["cv2_b"],
                        params["cv2_m"], params["cv2_v"])


# ----------------------------------------------------------------------------
if __name__ == "__main__":
    N, C1, H, W = 2, 8, 16, 16          # SPP(c1=8, c2=16), k=(5, 9, 13)
    C2 = 16
    c_ = C1 // 2

    key = jax.random.PRNGKey(0)
    ks = jax.random.split(key, 11)
    s1 = 1.0 / math.sqrt(C1)
    s2 = 1.0 / math.sqrt(4 * c_)
    params = {
        # cv1: Conv2d(C1, c_, 1, bias=False) weight squeezed to (c_, C1) + BN stats
        "cv1_w": jax.random.uniform(ks[0], (c_, C1), jnp.float32, -s1, s1),
        "cv1_g": jax.random.uniform(ks[1], (c_,), jnp.float32, 0.5, 1.5),
        "cv1_b": jax.random.uniform(ks[2], (c_,), jnp.float32, -0.1, 0.1),
        "cv1_m": jax.random.uniform(ks[3], (c_,), jnp.float32, -0.1, 0.1),
        "cv1_v": jax.random.uniform(ks[4], (c_,), jnp.float32, 0.5, 1.5),
        # cv2: Conv2d(4*c_, C2, 1, bias=False) weight squeezed to (C2, 4*c_) + BN stats
        "cv2_w": jax.random.uniform(ks[5], (C2, 4 * c_), jnp.float32, -s2, s2),
        "cv2_g": jax.random.uniform(ks[6], (C2,), jnp.float32, 0.5, 1.5),
        "cv2_b": jax.random.uniform(ks[7], (C2,), jnp.float32, -0.1, 0.1),
        "cv2_m": jax.random.uniform(ks[8], (C2,), jnp.float32, -0.1, 0.1),
        "cv2_v": jax.random.uniform(ks[9], (C2,), jnp.float32, 0.5, 1.5),
    }
    x = jax.random.normal(ks[10], (N, C1, H, W), jnp.float32)

    y = spp_forward(x, params)
    y = jax.block_until_ready(y)

    y_ref = reference_spp(x, params)
    assert y.shape == (N, C2, H, W)
    assert jnp.allclose(y, y_ref, atol=1e-4, rtol=1e-4), "mismatch vs reference"
    print("KERNEL_OK")
</pallas_src>

<mosaic_0001>
module attributes {stable_mosaic.version = 11 : i64} {
  func.func @spp_kernel(%arg0: i32, %arg1: memref<1x8x512xf32, #tpu.memory_space<vmem>>, %arg2: memref<4x8xf32, #tpu.memory_space<vmem>>, %arg3: memref<4x1xf32, #tpu.memory_space<vmem>>, %arg4: memref<16x4xf32, #tpu.memory_space<vmem>>, %arg5: memref<16x4xf32, #tpu.memory_space<vmem>>, %arg6: memref<16x4xf32, #tpu.memory_space<vmem>>, %arg7: memref<16x4xf32, #tpu.memory_space<vmem>>, %arg8: memref<16x1xf32, #tpu.memory_space<vmem>>, %arg9: memref<1x16x512xf32, #tpu.memory_space<vmem>>) attributes {dimension_semantics = [#tpu.dimension_semantics<parallel>], iteration_bounds = array<i64: 1>, scalar_prefetch = 0 : i64, scratch_operands = 0 : i64, tpu.core_type = #tpu.core_type<tc>, window_params = [{transform_indices = @transform_0, window_bounds = array<i64: 1, 8, 512>}, {pipeline_mode = #tpu.pipeline_mode<synchronous>, transform_indices = @transform_1, window_bounds = array<i64: 4, 8>}, {pipeline_mode = #tpu.pipeline_mode<synchronous>, transform_indices = @transform_2, window_bounds = array<i64: 4, 1>}, {pipeline_mode = #tpu.pipeline_mode<synchronous>, transform_indices = @transform_3, window_bounds = array<i64: 16, 4>}, {pipeline_mode = #tpu.pipeline_mode<synchronous>, transform_indices = @transform_4, window_bounds = array<i64: 16, 4>}, {pipeline_mode = #tpu.pipeline_mode<synchronous>, transform_indices = @transform_5, window_bounds = array<i64: 16, 4>}, {pipeline_mode = #tpu.pipeline_mode<synchronous>, transform_indices = @transform_6, window_bounds = array<i64: 16, 4>}, {pipeline_mode = #tpu.pipeline_mode<synchronous>, transform_indices = @transform_7, window_bounds = array<i64: 16, 1>}, {transform_indices = @transform_8, window_bounds = array<i64: 1, 16, 512>}]} {
    %c0 = arith.constant 0 : index
    %c0_0 = arith.constant 0 : index
    %c0_1 = arith.constant 0 : index
    %0 = vector.load %arg1[%c0, %c0_0, %c0_1] : memref<1x8x512xf32, #tpu.memory_space<vmem>>, vector<1x8x512xf32>
    %1 = vector.shape_cast %0 : vector<1x8x512xf32> to vector<8x512xf32>
    %c0_2 = arith.constant 0 : index
    %c0_3 = arith.constant 0 : index
    %2 = vector.load %arg2[%c0_2, %c0_3] : memref<4x8xf32, #tpu.memory_space<vmem>>, vector<4x8xf32>
    %cst = arith.constant dense<0.000000e+00> : vector<4x512xf32>
    %3 = tpu.matmul %2, %1, %cst {dimension_numbers = #tpu.dot_dimension_numbers<[1], [0], [0], [1], [0, 0, 1, 1], [], []>} : vector<4x8xf32>, vector<8x512xf32>, vector<4x512xf32> -> vector<4x512xf32>
    %c0_4 = arith.constant 0 : index
    %c0_5 = arith.constant 0 : index
    %4 = vector.load %arg3[%c0_4, %c0_5] : memref<4x1xf32, #tpu.memory_space<vmem>>, vector<4x1xf32>
    %5 = vector.broadcast %4 : vector<4x1xf32> to vector<4x512xf32>
    %6 = arith.addf %3, %5 : vector<4x512xf32>
    %cst_6 = arith.constant 0.000000e+00 : f32
    %7 = vector.broadcast %cst_6 : f32 to vector<4x512xf32>
    %8 = arith.subf %7, %6 : vector<4x512xf32>
    %9 = math.exp %8 : vector<4x512xf32>
    %cst_7 = arith.constant 1.000000e+00 : f32
    %10 = vector.broadcast %cst_7 : f32 to vector<4x512xf32>
    %11 = arith.addf %10, %9 : vector<4x512xf32>
    %cst_8 = arith.constant 1.000000e+00 : f32
    %12 = vector.broadcast %cst_8 : f32 to vector<4x512xf32>
    %13 = arith.divf %12, %11 : vector<4x512xf32>
    %14 = arith.mulf %6, %13 : vector<4x512xf32>
    %15 = tpu.iota {dimensions = array<i32: 1>} : vector<4x512xi32>
    %c15_i32 = arith.constant 15 : i32
    %16 = vector.broadcast %c15_i32 : i32 to vector<4x512xi32>
    %17 = arith.andi %15, %16 : vector<4x512xi32>
    %c4_i32 = arith.constant 4 : i32
    %18 = vector.broadcast %c4_i32 : i32 to vector<4x512xi32>
    %19 = arith.shrsi %15, %18 : vector<4x512xi32>
    %c15_i32_9 = arith.constant 15 : i32
    %20 = vector.broadcast %c15_i32_9 : i32 to vector<4x512xi32>
    %21 = arith.andi %19, %20 : vector<4x512xi32>
    %c-2_i32 = arith.constant -2 : i32
    %22 = vector.broadcast %c-2_i32 : i32 to vector<4x512xi32>
    %23 = arith.addi %17, %22 : vector<4x512xi32>
    %c0_i32 = arith.constant 0 : i32
    %24 = vector.broadcast %c0_i32 : i32 to vector<4x512xi32>
    %25 = arith.cmpi sge, %23, %24 : vector<4x512xi32>
    %c-2_i32_10 = arith.constant -2 : i32
    %26 = vector.broadcast %c-2_i32_10 : i32 to vector<4x512xi32>
    %27 = arith.addi %17, %26 : vector<4x512xi32>
    %c16_i32 = arith.constant 16 : i32
    %28 = vector.broadcast %c16_i32 : i32 to vector<4x512xi32>
    %29 = arith.cmpi slt, %27, %28 : vector<4x512xi32>
    %30 = arith.andi %25, %29 : vector<4x512xi1>
    %c-1_i32 = arith.constant -1 : i32
    %31 = vector.broadcast %c-1_i32 : i32 to vector<4x512xi32>
    %32 = arith.addi %17, %31 : vector<4x512xi32>
    %c0_i32_11 = arith.constant 0 : i32
    %33 = vector.broadcast %c0_i32_11 : i32 to vector<4x512xi32>
    %34 = arith.cmpi sge, %32, %33 : vector<4x512xi32>
    %c-1_i32_12 = arith.constant -1 : i32
    %35 = vector.broadcast %c-1_i32_12 : i32 to vector<4x512xi32>
    %36 = arith.addi %17, %35 : vector<4x512xi32>
    %c16_i32_13 = arith.constant 16 : i32
    %37 = vector.broadcast %c16_i32_13 : i32 to vector<4x512xi32>
    %38 = arith.cmpi slt, %36, %37 : vector<4x512xi32>
    %39 = arith.andi %34, %38 : vector<4x512xi1>
    %c1_i32 = arith.constant 1 : i32
    %40 = vector.broadcast %c1_i32 : i32 to vector<4x512xi32>
    %41 = arith.addi %17, %40 : vector<4x512xi32>
    %c0_i32_14 = arith.constant 0 : i32
    %42 = vector.broadcast %c0_i32_14 : i32 to vector<4x512xi32>
    %43 = arith.cmpi sge, %41, %42 : vector<4x512xi32>
    %c1_i32_15 = arith.constant 1 : i32
    %44 = vector.broadcast %c1_i32_15 : i32 to vector<4x512xi32>
    %45 = arith.addi %17, %44 : vector<4x512xi32>
    %c16_i32_16 = arith.constant 16 : i32
    %46 = vector.broadcast %c16_i32_16 : i32 to vector<4x512xi32>
    %47 = arith.cmpi slt, %45, %46 : vector<4x512xi32>
    %48 = arith.andi %43, %47 : vector<4x512xi1>
    %c2_i32 = arith.constant 2 : i32
    %49 = vector.broadcast %c2_i32 : i32 to vector<4x512xi32>
    %50 = arith.addi %17, %49 : vector<4x512xi32>
    %c0_i32_17 = arith.constant 0 : i32
    %51 = vector.broadcast %c0_i32_17 : i32 to vector<4x512xi32>
    %52 = arith.cmpi sge, %50, %51 : vector<4x512xi32>
    %c2_i32_18 = arith.constant 2 : i32
    %53 = vector.broadcast %c2_i32_18 : i32 to vector<4x512xi32>
    %54 = arith.addi %17, %53 : vector<4x512xi32>
    %c16_i32_19 = arith.constant 16 : i32
    %55 = vector.broadcast %c16_i32_19 : i32 to vector<4x512xi32>
    %56 = arith.cmpi slt, %54, %55 : vector<4x512xi32>
    %57 = arith.andi %52, %56 : vector<4x512xi1>
    %c-2_i32_20 = arith.constant -2 : i32
    %58 = vector.broadcast %c-2_i32_20 : i32 to vector<4x512xi32>
    %59 = arith.addi %21, %58 : vector<4x512xi32>
    %c0_i32_21 = arith.constant 0 : i32
    %60 = vector.broadcast %c0_i32_21 : i32 to vector<4x512xi32>
    %61 = arith.cmpi sge, %59, %60 : vector<4x512xi32>
    %c-2_i32_22 = arith.constant -2 : i32
    %62 = vector.broadcast %c-2_i32_22 : i32 to vector<4x512xi32>
    %63 = arith.addi %21, %62 : vector<4x512xi32>
    %c16_i32_23 = arith.constant 16 : i32
    %64 = vector.broadcast %c16_i32_23 : i32 to vector<4x512xi32>
    %65 = arith.cmpi slt, %63, %64 : vector<4x512xi32>
    %66 = arith.andi %61, %65 : vector<4x512xi1>
    %c-1_i32_24 = arith.constant -1 : i32
    %67 = vector.broadcast %c-1_i32_24 : i32 to vector<4x512xi32>
    %68 = arith.addi %21, %67 : vector<4x512xi32>
    %c0_i32_25 = arith.constant 0 : i32
    %69 = vector.broadcast %c0_i32_25 : i32 to vector<4x512xi32>
    %70 = arith.cmpi sge, %68, %69 : vector<4x512xi32>
    %c-1_i32_26 = arith.constant -1 : i32
    %71 = vector.broadcast %c-1_i32_26 : i32 to vector<4x512xi32>
    %72 = arith.addi %21, %71 : vector<4x512xi32>
    %c16_i32_27 = arith.constant 16 : i32
    %73 = vector.broadcast %c16_i32_27 : i32 to vector<4x512xi32>
    %74 = arith.cmpi slt, %72, %73 : vector<4x512xi32>
    %75 = arith.andi %70, %74 : vector<4x512xi1>
    %c1_i32_28 = arith.constant 1 : i32
    %76 = vector.broadcast %c1_i32_28 : i32 to vector<4x512xi32>
    %77 = arith.addi %21, %76 : vector<4x512xi32>
    %c0_i32_29 = arith.constant 0 : i32
    %78 = vector.broadcast %c0_i32_29 : i32 to vector<4x512xi32>
    %79 = arith.cmpi sge, %77, %78 : vector<4x512xi32>
    %c1_i32_30 = arith.constant 1 : i32
    %80 = vector.broadcast %c1_i32_30 : i32 to vector<4x512xi32>
    %81 = arith.addi %21, %80 : vector<4x512xi32>
    %c16_i32_31 = arith.constant 16 : i32
    %82 = vector.broadcast %c16_i32_31 : i32 to vector<4x512xi32>
    %83 = arith.cmpi slt, %81, %82 : vector<4x512xi32>
    %84 = arith.andi %79, %83 : vector<4x512xi1>
    %c2_i32_32 = arith.constant 2 : i32
    %85 = vector.broadcast %c2_i32_32 : i32 to vector<4x512xi32>
    %86 = arith.addi %21, %85 : vector<4x512xi32>
    %c0_i32_33 = arith.constant 0 : i32
    %87 = vector.broadcast %c0_i32_33 : i32 to vector<4x512xi32>
    %88 = arith.cmpi sge, %86, %87 : vector<4x512xi32>
    %c2_i32_34 = arith.constant 2 : i32
    %89 = vector.broadcast %c2_i32_34 : i32 to vector<4x512xi32>
    %90 = arith.addi %21, %89 : vector<4x512xi32>
    %c16_i32_35 = arith.constant 16 : i32
    %91 = vector.broadcast %c16_i32_35 : i32 to vector<4x512xi32>
    %92 = arith.cmpi slt, %90, %91 : vector<4x512xi32>
    %93 = arith.andi %88, %92 : vector<4x512xi1>
    %c2_i32_36 = arith.constant 2 : i32
    %94 = tpu.dynamic_rotate %14 by %c2_i32_36 dim 1 : vector<4x512xf32>, i32 -> vector<4x512xf32>
    %95 = arith.maximumf %14, %94 : vector<4x512xf32>
    %96 = arith.select %30, %95, %14 : vector<4x512xi1>, vector<4x512xf32>
    %c1_i32_37 = arith.constant 1 : i32
    %97 = tpu.dynamic_rotate %14 by %c1_i32_37 dim 1 : vector<4x512xf32>, i32 -> vector<4x512xf32>
    %98 = arith.maximumf %96, %97 : vector<4x512xf32>
    %99 = arith.select %39, %98, %96 : vector<4x512xi1>, vector<4x512xf32>
    %c511_i32 = arith.constant 511 : i32
    %100 = tpu.dynamic_rotate %14 by %c511_i32 dim 1 : vector<4x512xf32>, i32 -> vector<4x512xf32>
    %101 = arith.maximumf %99, %100 : vector<4x512xf32>
    %102 = arith.select %48, %101, %99 : vector<4x512xi1>, vector<4x512xf32>
    %c510_i32 = arith.constant 510 : i32
    %103 = tpu.dynamic_rotate %14 by %c510_i32 dim 1 : vector<4x512xf32>, i32 -> vector<4x512xf32>
    %104 = arith.maximumf %102, %103 : vector<4x512xf32>
    %105 = arith.select %57, %104, %102 : vector<4x512xi1>, vector<4x512xf32>
    %c32_i32 = arith.constant 32 : i32
    %106 = tpu.dynamic_rotate %105 by %c32_i32 dim 1 : vector<4x512xf32>, i32 -> vector<4x512xf32>
    %107 = arith.maximumf %105, %106 : vector<4x512xf32>
    %108 = arith.select %66, %107, %105 : vector<4x512xi1>, vector<4x512xf32>
    %c16_i32_38 = arith.constant 16 : i32
    %109 = tpu.dynamic_rotate %105 by %c16_i32_38 dim 1 : vector<4x512xf32>, i32 -> vector<4x512xf32>
    %110 = arith.maximumf %108, %109 : vector<4x512xf32>
    %111 = arith.select %75, %110, %108 : vector<4x512xi1>, vector<4x512xf32>
    %c496_i32 = arith.constant 496 : i32
    %112 = tpu.dynamic_rotate %105 by %c496_i32 dim 1 : vector<4x512xf32>, i32 -> vector<4x512xf32>
    %113 = arith.maximumf %111, %112 : vector<4x512xf32>
    %114 = arith.select %84, %113, %111 : vector<4x512xi1>, vector<4x512xf32>
    %c480_i32 = arith.constant 480 : i32
    %115 = tpu.dynamic_rotate %105 by %c480_i32 dim 1 : vector<4x512xf32>, i32 -> vector<4x512xf32>
    %116 = arith.maximumf %114, %115 : vector<4x512xf32>
    %117 = arith.select %93, %116, %114 : vector<4x512xi1>, vector<4x512xf32>
    %c2_i32_39 = arith.constant 2 : i32
    %118 = tpu.dynamic_rotate %117 by %c2_i32_39 dim 1 : vector<4x512xf32>, i32 -> vector<4x512xf32>
    %119 = arith.maximumf %117, %118 : vector<4x512xf32>
    %120 = arith.select %30, %119, %117 : vector<4x512xi1>, vector<4x512xf32>
    %c1_i32_40 = arith.constant 1 : i32
    %121 = tpu.dynamic_rotate %117 by %c1_i32_40 dim 1 : vector<4x512xf32>, i32 -> vector<4x512xf32>
    %122 = arith.maximumf %120, %121 : vector<4x512xf32>
    %123 = arith.select %39, %122, %120 : vector<4x512xi1>, vector<4x512xf32>
    %c511_i32_41 = arith.constant 511 : i32
    %124 = tpu.dynamic_rotate %117 by %c511_i32_41 dim 1 : vector<4x512xf32>, i32 -> vector<4x512xf32>
    %125 = arith.maximumf %123, %124 : vector<4x512xf32>
    %126 = arith.select %48, %125, %123 : vector<4x512xi1>, vector<4x512xf32>
    %c510_i32_42 = arith.constant 510 : i32
    %127 = tpu.dynamic_rotate %117 by %c510_i32_42 dim 1 : vector<4x512xf32>, i32 -> vector<4x512xf32>
    %128 = arith.maximumf %126, %127 : vector<4x512xf32>
    %129 = arith.select %57, %128, %126 : vector<4x512xi1>, vector<4x512xf32>
    %c32_i32_43 = arith.constant 32 : i32
    %130 = tpu.dynamic_rotate %129 by %c32_i32_43 dim 1 : vector<4x512xf32>, i32 -> vector<4x512xf32>
    %131 = arith.maximumf %129, %130 : vector<4x512xf32>
    %132 = arith.select %66, %131, %129 : vector<4x512xi1>, vector<4x512xf32>
    %c16_i32_44 = arith.constant 16 : i32
    %133 = tpu.dynamic_rotate %129 by %c16_i32_44 dim 1 : vector<4x512xf32>, i32 -> vector<4x512xf32>
    %134 = arith.maximumf %132, %133 : vector<4x512xf32>
    %135 = arith.select %75, %134, %132 : vector<4x512xi1>, vector<4x512xf32>
    %c496_i32_45 = arith.constant 496 : i32
    %136 = tpu.dynamic_rotate %129 by %c496_i32_45 dim 1 : vector<4x512xf32>, i32 -> vector<4x512xf32>
    %137 = arith.maximumf %135, %136 : vector<4x512xf32>
    %138 = arith.select %84, %137, %135 : vector<4x512xi1>, vector<4x512xf32>
    %c480_i32_46 = arith.constant 480 : i32
    %139 = tpu.dynamic_rotate %129 by %c480_i32_46 dim 1 : vector<4x512xf32>, i32 -> vector<4x512xf32>
    %140 = arith.maximumf %138, %139 : vector<4x512xf32>
    %141 = arith.select %93, %140, %138 : vector<4x512xi1>, vector<4x512xf32>
    %c2_i32_47 = arith.constant 2 : i32
    %142 = tpu.dynamic_rotate %141 by %c2_i32_47 dim 1 : vector<4x512xf32>, i32 -> vector<4x512xf32>
    %143 = arith.maximumf %141, %142 : vector<4x512xf32>
    %144 = arith.select %30, %143, %141 : vector<4x512xi1>, vector<4x512xf32>
    %c1_i32_48 = arith.constant 1 : i32
    %145 = tpu.dynamic_rotate %141 by %c1_i32_48 dim 1 : vector<4x512xf32>, i32 -> vector<4x512xf32>
    %146 = arith.maximumf %144, %145 : vector<4x512xf32>
    %147 = arith.select %39, %146, %144 : vector<4x512xi1>, vector<4x512xf32>
    %c511_i32_49 = arith.constant 511 : i32
    %148 = tpu.dynamic_rotate %141 by %c511_i32_49 dim 1 : vector<4x512xf32>, i32 -> vector<4x512xf32>
    %149 = arith.maximumf %147, %148 : vector<4x512xf32>
    %150 = arith.select %48, %149, %147 : vector<4x512xi1>, vector<4x512xf32>
    %c510_i32_50 = arith.constant 510 : i32
    %151 = tpu.dynamic_rotate %141 by %c510_i32_50 dim 1 : vector<4x512xf32>, i32 -> vector<4x512xf32>
    %152 = arith.maximumf %150, %151 : vector<4x512xf32>
    %153 = arith.select %57, %152, %150 : vector<4x512xi1>, vector<4x512xf32>
    %c32_i32_51 = arith.constant 32 : i32
    %154 = tpu.dynamic_rotate %153 by %c32_i32_51 dim 1 : vector<4x512xf32>, i32 -> vector<4x512xf32>
    %155 = arith.maximumf %153, %154 : vector<4x512xf32>
    %156 = arith.select %66, %155, %153 : vector<4x512xi1>, vector<4x512xf32>
    %c16_i32_52 = arith.constant 16 : i32
    %157 = tpu.dynamic_rotate %153 by %c16_i32_52 dim 1 : vector<4x512xf32>, i32 -> vector<4x512xf32>
    %158 = arith.maximumf %156, %157 : vector<4x512xf32>
    %159 = arith.select %75, %158, %156 : vector<4x512xi1>, vector<4x512xf32>
    %c496_i32_53 = arith.constant 496 : i32
    %160 = tpu.dynamic_rotate %153 by %c496_i32_53 dim 1 : vector<4x512xf32>, i32 -> vector<4x512xf32>
    %161 = arith.maximumf %159, %160 : vector<4x512xf32>
    %162 = arith.select %84, %161, %159 : vector<4x512xi1>, vector<4x512xf32>
    %c480_i32_54 = arith.constant 480 : i32
    %163 = tpu.dynamic_rotate %153 by %c480_i32_54 dim 1 : vector<4x512xf32>, i32 -> vector<4x512xf32>
    %164 = arith.maximumf %162, %163 : vector<4x512xf32>
    %165 = arith.select %93, %164, %162 : vector<4x512xi1>, vector<4x512xf32>
    %c0_55 = arith.constant 0 : index
    %c0_56 = arith.constant 0 : index
    %166 = vector.load %arg4[%c0_55, %c0_56] : memref<16x4xf32, #tpu.memory_space<vmem>>, vector<16x4xf32>
    %cst_57 = arith.constant dense<0.000000e+00> : vector<16x512xf32>
    %167 = tpu.matmul %166, %14, %cst_57 {dimension_numbers = #tpu.dot_dimension_numbers<[1], [0], [0], [1], [0, 0, 1, 1], [], []>} : vector<16x4xf32>, vector<4x512xf32>, vector<16x512xf32> -> vector<16x512xf32>
    %c0_58 = arith.constant 0 : index
    %c0_59 = arith.constant 0 : index
    %168 = vector.load %arg5[%c0_58, %c0_59] : memref<16x4xf32, #tpu.memory_space<vmem>>, vector<16x4xf32>
    %cst_60 = arith.constant dense<0.000000e+00> : vector<16x512xf32>
    %169 = tpu.matmul %168, %117, %cst_60 {dimension_numbers = #tpu.dot_dimension_numbers<[1], [0], [0], [1], [0, 0, 1, 1], [], []>} : vector<16x4xf32>, vector<4x512xf32>, vector<16x512xf32> -> vector<16x512xf32>
    %170 = arith.addf %167, %169 : vector<16x512xf32>
    %c0_61 = arith.constant 0 : index
    %c0_62 = arith.constant 0 : index
    %171 = vector.load %arg6[%c0_61, %c0_62] : memref<16x4xf32, #tpu.memory_space<vmem>>, vector<16x4xf32>
    %cst_63 = arith.constant dense<0.000000e+00> : vector<16x512xf32>
    %172 = tpu.matmul %171, %141, %cst_63 {dimension_numbers = #tpu.dot_dimension_numbers<[1], [0], [0], [1], [0, 0, 1, 1], [], []>} : vector<16x4xf32>, vector<4x512xf32>, vector<16x512xf32> -> vector<16x512xf32>
    %173 = arith.addf %170, %172 : vector<16x512xf32>
    %c0_64 = arith.constant 0 : index
    %c0_65 = arith.constant 0 : index
    %174 = vector.load %arg7[%c0_64, %c0_65] : memref<16x4xf32, #tpu.memory_space<vmem>>, vector<16x4xf32>
    %cst_66 = arith.constant dense<0.000000e+00> : vector<16x512xf32>
    %175 = tpu.matmul %174, %165, %cst_66 {dimension_numbers = #tpu.dot_dimension_numbers<[1], [0], [0], [1], [0, 0, 1, 1], [], []>} : vector<16x4xf32>, vector<4x512xf32>, vector<16x512xf32> -> vector<16x512xf32>
    %176 = arith.addf %173, %175 : vector<16x512xf32>
    %c0_67 = arith.constant 0 : index
    %c0_68 = arith.constant 0 : index
    %177 = vector.load %arg8[%c0_67, %c0_68] : memref<16x1xf32, #tpu.memory_space<vmem>>, vector<16x1xf32>
    %178 = vector.broadcast %177 : vector<16x1xf32> to vector<16x512xf32>
    %179 = arith.addf %176, %178 : vector<16x512xf32>
    %cst_69 = arith.constant 0.000000e+00 : f32
    %180 = vector.broadcast %cst_69 : f32 to vector<16x512xf32>
    %181 = arith.subf %180, %179 : vector<16x512xf32>
    %182 = math.exp %181 : vector<16x512xf32>
    %cst_70 = arith.constant 1.000000e+00 : f32
    %183 = vector.broadcast %cst_70 : f32 to vector<16x512xf32>
    %184 = arith.addf %183, %182 : vector<16x512xf32>
    %cst_71 = arith.constant 1.000000e+00 : f32
    %185 = vector.broadcast %cst_71 : f32 to vector<16x512xf32>
    %186 = arith.divf %185, %184 : vector<16x512xf32>
    %187 = arith.mulf %179, %186 : vector<16x512xf32>
    %c0_72 = arith.constant 0 : index
    %c0_73 = arith.constant 0 : index
    %c0_74 = arith.constant 0 : index
    %188 = vector.load %arg9[%c0_72, %c0_73, %c0_74] : memref<1x16x512xf32, #tpu.memory_space<vmem>>, vector<1x16x512xf32>
    %189 = vector.shape_cast %188 : vector<1x16x512xf32> to vector<16x512xf32>
    %190 = vector.shape_cast %187 : vector<16x512xf32> to vector<1x16x512xf32>
    tpu.vector_store %arg9[%c0_72, %c0_73, %c0_74], %190 {strides = array<i32>} : memref<1x16x512xf32, #tpu.memory_space<vmem>>, vector<1x16x512xf32>,
    return
  }
  func.func @transform_0(%arg0: i32) -> (i32, i32, i32) {
    %c0_i32 = arith.constant 0 : i32
    %c0_i32_0 = arith.constant 0 : i32
    %c0_i32_1 = arith.constant 0 : i32
    return %arg0, %c0_i32, %c0_i32_0 : i32, i32, i32
  }
  func.func @transform_1(%arg0: i32) -> (i32, i32) {
    %c0_i32 = arith.constant 0 : i32
    %c0_i32_0 = arith.constant 0 : i32
    %c0_i32_1 = arith.constant 0 : i32
    return %c0_i32, %c0_i32_0 : i32, i32
  }
  func.func @transform_2(%arg0: i32) -> (i32, i32) {
    %c0_i32 = arith.constant 0 : i32
    %c0_i32_0 = arith.constant 0 : i32
    %c0_i32_1 = arith.constant 0 : i32
    return %c0_i32, %c0_i32_0 : i32, i32
  }
  func.func @transform_3(%arg0: i32) -> (i32, i32) {
    %c0_i32 = arith.constant 0 : i32
    %c0_i32_0 = arith.constant 0 : i32
    %c0_i32_1 = arith.constant 0 : i32
    return %c0_i32, %c0_i32_0 : i32, i32
  }
  func.func @transform_4(%arg0: i32) -> (i32, i32) {
    %c0_i32 = arith.constant 0 : i32
    %c0_i32_0 = arith.constant 0 : i32
    %c0_i32_1 = arith.constant 0 : i32
    return %c0_i32, %c0_i32_0 : i32, i32
  }
  func.func @transform_5(%arg0: i32) -> (i32, i32) {
    %c0_i32 = arith.constant 0 : i32
    %c0_i32_0 = arith.constant 0 : i32
    %c0_i32_1 = arith.constant 0 : i32
    return %c0_i32, %c0_i32_0 : i32, i32
  }
  func.func @transform_6(%arg0: i32) -> (i32, i32) {
    %c0_i32 = arith.constant 0 : i32
    %c0_i32_0 = arith.constant 0 : i32
    %c0_i32_1 = arith.constant 0 : i32
    return %c0_i32, %c0_i32_0 : i32, i32
  }
  func.func @transform_7(%arg0: i32) -> (i32, i32) {
    %c0_i32 = arith.constant 0 : i32
    %c0_i32_0 = arith.constant 0 : i32
    %c0_i32_1 = arith.constant 0 : i32
    return %c0_i32, %c0_i32_0 : i32, i32
  }
  func.func @transform_8(%arg0: i32) -> (i32, i32, i32) {
    %c0_i32 = arith.constant 0 : i32
    %c0_i32_0 = arith.constant 0 : i32
    %c0_i32_1 = arith.constant 0 : i32
    return %arg0, %c0_i32, %c0_i32_0 : i32, i32, i32
  }
}

</mosaic_0001>

<llo_original>
// kernel: tpu_custom_call.1
$region0: #{tpu_custom_call.1}
  #allocation0 [shape = 'u32[]', space=smem, size = 0x4, offset = 0x4, fixed_abs, tag = 'smem constant byte address 0x4 - core index']
  #allocation1 [shape = 'u32[144,128]{1,0:T(1,128)}', space=vmem, size = 0x12000, scoped, tag = 'internal scratch']
  %s0 = inlined_call_operand.vmem [shape: f32[1,8,512], index: 0, kind: input, shape index: {}]
  %s1 = inlined_call_operand.vmem [shape: f32[4,8], index: 1, kind: input, shape index: {}]
  %s2 = inlined_call_operand.vmem [shape: f32[4,1], index: 2, kind: input, shape index: {}]
  %s3 = inlined_call_operand.vmem [shape: f32[16,4], index: 3, kind: input, shape index: {}]
  %s4 = inlined_call_operand.vmem [shape: f32[16,4], index: 4, kind: input, shape index: {}]
  %s5 = inlined_call_operand.vmem [shape: f32[16,4], index: 5, kind: input, shape index: {}]
  %s6 = inlined_call_operand.vmem [shape: f32[16,4], index: 6, kind: input, shape index: {}]
  %s7 = inlined_call_operand.vmem [shape: f32[16,1], index: 7, kind: input, shape index: {}]
  %s8 = inlined_call_operand.hbm [shape: f32[1,16,512], index: 8, kind: output, shape index: {}]
  %s9 = sld [smem:[#allocation0]]
  $region42: #{tpu_custom_call.1} parent=0
    _
  %s11 = ssub.s32 1, %s9
  %s12 = scalar_select 0, %s11, %s9
  $region1: #{tpu_custom_call.1} parent=0
    #allocation2 [shape = 'u8[32768]{0}', space=vmem, size = 0x8000, scoped, tag = 'output window, operand 0, single buffered']
    #allocation3 [shape = 's32[1]{0}', space=sflag, size = 0x4, scoped, tag = 'scoped memory for tpu_custom_call.1']
    %13 = vsyncpa [#allocation3], 0
    // Predicated region
    $region2: #{tpu_custom_call.1} parent=1 // pred_check
      _
    $region3: #{tpu_custom_call.1} parent=1 // pred_check_branch
      %15 = sbr.rel (0) target = $region5
    $region4: #{tpu_custom_call.1} parent=1 // pred_region
      _
    $region5: #{tpu_custom_call.1} parent=1 // pred_fallthru
      _
    // Predicated region
    $region6: #{tpu_custom_call.1} parent=1 // pred_check
      _
    $region7: #{tpu_custom_call.1} parent=1 // pred_check_branch
      %17 = sbr.rel (0) target = $region9
    $region8: #{tpu_custom_call.1} parent=1 // pred_region
      _
    $region9: #{tpu_custom_call.1} parent=1 // pred_fallthru
      _
    // Predicated region
    $region10: #{tpu_custom_call.1} parent=1 // pred_check
      _
    $region11: #{tpu_custom_call.1} parent=1 // pred_check_branch
      %19 = sbr.rel (0) target = $region13
    $region12: #{tpu_custom_call.1} parent=1 // pred_region
      _
    $region13: #{tpu_custom_call.1} parent=1 // pred_fallthru
      _
    // Predicated region
    $region14: #{tpu_custom_call.1} parent=1 // pred_check
      _
    $region15: #{tpu_custom_call.1} parent=1 // pred_check_branch
      %21 = sbr.rel (0) target = $region17
    $region16: #{tpu_custom_call.1} parent=1 // pred_region
      _
    $region17: #{tpu_custom_call.1} parent=1 // pred_fallthru
      _
    // Predicated region
    $region18: #{tpu_custom_call.1} parent=1 // pred_check
      _
    $region19: #{tpu_custom_call.1} parent=1 // pred_check_branch
      %23 = sbr.rel (0) target = $region21
    $region20: #{tpu_custom_call.1} parent=1 // pred_region
      _
    $region21: #{tpu_custom_call.1} parent=1 // pred_fallthru
      _
    // Predicated region
    $region22: #{tpu_custom_call.1} parent=1 // pred_check
      _
    $region23: #{tpu_custom_call.1} parent=1 // pred_check_branch
      %25 = sbr.rel (0) target = $region25
    $region24: #{tpu_custom_call.1} parent=1 // pred_region
      _
    $region25: #{tpu_custom_call.1} parent=1 // pred_fallthru
      _
    // Predicated region
    $region26: #{tpu_custom_call.1} parent=1 // pred_check
      _
    $region27: #{tpu_custom_call.1} parent=1 // pred_check_branch
      %27 = sbr.rel (0) target = $region29
    $region28: #{tpu_custom_call.1} parent=1 // pred_region
      _
    $region29: #{tpu_custom_call.1} parent=1 // pred_fallthru
      _
    // Predicated region
    $region30: #{tpu_custom_call.1} parent=1 // pred_check
      _
    $region31: #{tpu_custom_call.1} parent=1 // pred_check_branch
      %29 = sbr.rel (0) target = $region33
    $region32: #{tpu_custom_call.1} parent=1 // pred_region
      _
    $region33: #{tpu_custom_call.1} parent=1 // pred_fallthru
      _
    %v30 = vld [vmem:[%s0] sm:$0xff]
    %v31 = vld [vmem:[%s0 + $0x8] sm:$0xff]
    %v32 = vld [vmem:[%s0 + $0x10] sm:$0xff]
    %v33 = vld [vmem:[%s0 + $0x18] sm:$0xff]
    %v34 = vld [vmem:[%s1] sm:$0xf]
    %v35 = vld [vmem:[%s2] sm:$0xf]
    %37 = vset.pattern.permute.xlu0 0
    %38 = vperm.xlu0 %37, %v35
    %v39 = vpop.permute.xlu0 %38
    %vm41 = vcmask 64512
    %v43 = vsel %vm41, %v34, 0
    %45 = vmatprep.subr.mxu0 %v31
    %46 = vmatpush1.msra.mxu0 %v30
    %47 = vmatprep.subr.mxu0 0.0
    %48 = vmatpush1.msra.mxu0 0.0
    %49 = vmatprep.subr.mxu0 0.0
    %50 = vmatpush1.msra.mxu0 0.0
    %51 = vmatprep.subr.mxu0 0.0
    %52 = vmatpush1.msra.mxu0 0.0
    %53 = vmatprep.subr.mxu0 0.0
    %54 = vmatpush1.msra.mxu0 0.0
    %55 = vmatprep.subr.mxu0 0.0
    %56 = vmatpush1.msra.mxu0 0.0
    %57 = vmatprep.subr.mxu0 0.0
    %58 = vmatpush1.msra.mxu0 0.0
    %59 = vmatprep.subr.mxu0 0.0
    %60 = vmatpush1.msra.mxu0 0.0
    %61 = vmatprep.subr.mxu0 0.0
    %62 = vmatpush1.msra.mxu0 0.0
    %63 = vmatprep.subr.mxu0 0.0
    %64 = vmatpush1.msra.mxu0 0.0
    %65 = vmatprep.subr.mxu0 0.0
    %66 = vmatpush1.msra.mxu0 0.0
    %67 = vmatprep.subr.mxu0 0.0
    %68 = vmatpush1.msra.mxu0 0.0
    %69 = vmatprep.subr.mxu0 0.0
    %70 = vmatpush1.msra.mxu0 0.0
    %71 = vmatprep.subr.mxu0 0.0
    %72 = vmatpush1.msra.mxu0 0.0
    %73 = vmatprep.subr.mxu0 0.0
    %74 = vmatpush1.msra.mxu0 0.0
    %75 = vmatprep.subr.mxu0 0.0
    %76 = vmatpush1.msra.mxu0 0.0
    %77 = vmatprep.subr.mxu0 0.0
    %78 = vmatpush1.msra.mxu0 0.0
    %79 = vmatprep.subr.mxu0 0.0
    %80 = vmatpush1.msra.mxu0 0.0
    %81 = vmatprep.subr.mxu0 0.0
    %82 = vmatpush1.msra.mxu0 0.0
    %83 = vmatprep.subr.mxu0 0.0
    %84 = vmatpush1.msra.mxu0 0.0
    %85 = vmatprep.subr.mxu0 0.0
    %86 = vmatpush1.msra.mxu0 0.0
    %87 = vmatprep.subr.mxu0 0.0
    %88 = vmatpush1.msra.mxu0 0.0
    %89 = vmatprep.subr.mxu0 0.0
    %90 = vmatpush1.msra.mxu0 0.0
    %91 = vmatprep.subr.mxu0 0.0
    %92 = vmatpush1.msra.mxu0 0.0
    %93 = vmatprep.subr.mxu0 0.0
    %94 = vmatpush1.msra.mxu0 0.0
    %95 = vmatprep.subr.mxu0 0.0
    %96 = vmatpush1.msra.mxu0 0.0
    %97 = vmatprep.subr.mxu0 0.0
    %98 = vmatpush1.msra.mxu0 0.0
    %99 = vmatprep.subr.mxu0 0.0
    %100 = vmatpush1.msra.mxu0 0.0
    %101 = vmatprep.subr.mxu0 0.0
    %102 = vmatpush1.msra.mxu0 0.0
    %103 = vmatprep.subr.mxu0 0.0
    %104 = vmatpush1.msra.mxu0 0.0
    %105 = vmatprep.subr.mxu0 0.0
    %106 = vmatpush1.msra.mxu0 0.0
    %107 = vmatprep.subr.mxu0 0.0
    %108 = vmatpush1.msra.mxu0 0.0
    %109 = vmatprep.mubr.f32.mxu0 0.0
    %110 = vmatmul.mubr.f32.gmra.mrb[0].mxu0 %v43
    %v111 = vpop.f32.mrb[0].mxu0
    %v112 = vadd.f32 %v39, %v111
    %v113 = vpop.f32.mrb[0].mxu0
    %v114 = vadd.f32 %v39, %v113
    %115 = vdwg.mxu0
    %116 = vmatprep.subr.mxu0 %v33
    %117 = vmatpush1.msra.mxu0 %v32
    %118 = vmatprep.subr.mxu0 0.0
    %119 = vmatpush1.msra.mxu0 0.0
    %120 = vmatprep.subr.mxu0 0.0
    %121 = vmatpush1.msra.mxu0 0.0
    %122 = vmatprep.subr.mxu0 0.0
    %123 = vmatpush1.msra.mxu0 0.0
    %124 = vmatprep.subr.mxu0 0.0
    %125 = vmatpush1.msra.mxu0 0.0
    %126 = vmatprep.subr.mxu0 0.0
    %127 = vmatpush1.msra.mxu0 0.0
    %128 = vmatprep.subr.mxu0 0.0
    %129 = vmatpush1.msra.mxu0 0.0
    %130 = vmatprep.subr.mxu0 0.0
    %131 = vmatpush1.msra.mxu0 0.0
    %132 = vmatprep.subr.mxu0 0.0
    %133 = vmatpush1.msra.mxu0 0.0
    %134 = vmatprep.subr.mxu0 0.0
    %135 = vmatpush1.msra.mxu0 0.0
    %136 = vmatprep.subr.mxu0 0.0
    %137 = vmatpush1.msra.mxu0 0.0
    %138 = vmatprep.subr.mxu0 0.0
    %139 = vmatpush1.msra.mxu0 0.0
    %140 = vmatprep.subr.mxu0 0.0
    %141 = vmatpush1.msra.mxu0 0.0
    %142 = vmatprep.subr.mxu0 0.0
    %143 = vmatpush1.msra.mxu0 0.0
    %144 = vmatprep.subr.mxu0 0.0
    %145 = vmatpush1.msra.mxu0 0.0
    %146 = vmatprep.subr.mxu0 0.0
    %147 = vmatpush1.msra.mxu0 0.0
    %148 = vmatprep.subr.mxu0 0.0
    %149 = vmatpush1.msra.mxu0 0.0
    %150 = vmatprep.subr.mxu0 0.0
    %151 = vmatpush1.msra.mxu0 0.0
    %152 = vmatprep.subr.mxu0 0.0
    %153 = vmatpush1.msra.mxu0 0.0
    %154 = vmatprep.subr.mxu0 0.0
    %155 = vmatpush1.msra.mxu0 0.0
    %156 = vmatprep.subr.mxu0 0.0
    %157 = vmatpush1.msra.mxu0 0.0
    %158 = vmatprep.subr.mxu0 0.0
    %159 = vmatpush1.msra.mxu0 0.0
    %160 = vmatprep.subr.mxu0 0.0
    %161 = vmatpush1.msra.mxu0 0.0
    %162 = vmatprep.subr.mxu0 0.0
    %163 = vmatpush1.msra.mxu0 0.0
    %164 = vmatprep.subr.mxu0 0.0
    %165 = vmatpush1.msra.mxu0 0.0
    %166 = vmatprep.subr.mxu0 0.0
    %167 = vmatpush1.msra.mxu0 0.0
    %168 = vmatprep.subr.mxu0 0.0
    %169 = vmatpush1.msra.mxu0 0.0
    %170 = vmatprep.subr.mxu0 0.0
    %171 = vmatpush1.msra.mxu0 0.0
    %172 = vmatprep.subr.mxu0 0.0
    %173 = vmatpush1.msra.mxu0 0.0
    %174 = vmatprep.subr.mxu0 0.0
    %175 = vmatpush1.msra.mxu0 0.0
    %176 = vmatprep.subr.mxu0 0.0
    %177 = vmatpush1.msra.mxu0 0.0
    %178 = vmatprep.subr.mxu0 0.0
    %179 = vmatpush1.msra.mxu0 0.0
    %180 = vmatprep.mubr.f32.mxu0 0.0
    %181 = vmatmul.mubr.f32.gmra.mrb[0].mxu0 %v43
    %v182 = vpop.f32.mrb[0].mxu0
    %v183 = vadd.f32 %v39, %v182
    %v184 = vpop.f32.mrb[0].mxu0
    %v185 = vadd.f32 %v39, %v184
    %186 = vdwg.mxu0
    %v187 = vsub.f32 0.0, %v112
    %v188 = vsub.f32 0.0, %v114
    %v189 = vsub.f32 0.0, %v183
    %v190 = vsub.f32 0.0, %v185
    %v191 = vmul.f32 %v187, 1.442695
    %v192 = vpow.pop %v191
    %v193 = vmul.f32 %v188, 1.442695
    %v194 = vpow.pop %v193
    %v195 = vmul.f32 %v189, 1.442695
    %v196 = vpow.pop %v195
    %v197 = vmul.f32 %v190, 1.442695
    %v198 = vpow.pop %v197
    %v199 = vadd.f32 %v192, 1.0
    %v200 = vadd.f32 %v194, 1.0
    %v201 = vadd.f32 %v196, 1.0
    %v202 = vadd.f32 %v198, 1.0
    %v203 = vrcp.pop %v199
    %v204 = vmul.f32 1.0, %v203
    %v205 = vrcp.pop %v200
    %v206 = vmul.f32 1.0, %v205
    %v207 = vrcp.pop %v201
    %v208 = vmul.f32 1.0, %v207
    %v209 = vrcp.pop %v202
    %v210 = vmul.f32 1.0, %v209
    %v211 = vmul.f32 %v112, %v204
    %v212 = vmul.f32 %v114, %v206
    %v213 = vmul.f32 %v183, %v208
    %v214 = vmul.f32 %v185, %v210
    %v215 = vlaneseq
    %v216 = vand.u32 %v215, 127
    %v217 = vadd.s32 %v216, 128
    %v218 = vadd.s32 %v216, 256
    %v219 = vadd.s32 %v216, 384
    %v220 = vand.u32 %v216, 15
    %v221 = vand.u32 %v217, 15
    %v222 = vand.u32 %v218, 15
    %v223 = vand.u32 %v219, 15
    %v224 = vshra.s32 %v216, 4
    %v225 = vshra.s32 %v217, 4
    %v226 = vshra.s32 %v218, 4
    %v227 = vshra.s32 %v219, 4
    %v228 = vand.u32 %v224, 15
    %v229 = vand.u32 %v225, 15
    %v230 = vand.u32 %v226, 15
    %v231 = vand.u32 %v227, 15
    %v232 = vadd.s32 %v220, 4294967294
    %v233 = vadd.s32 %v221, 4294967294
    %v234 = vadd.s32 %v222, 4294967294
    %v235 = vadd.s32 %v223, 4294967294
    %vm236 = vcmp.ge.s32.totalorder %v232, 0
    %vm237 = vcmp.ge.s32.totalorder %v233, 0
    %vm238 = vcmp.ge.s32.totalorder %v234, 0
    %vm239 = vcmp.ge.s32.totalorder %v235, 0
    %vm240 = vcmp.lt.s32.totalorder %v232, 16
    %vm241 = vcmp.lt.s32.totalorder %v233, 16
    %vm242 = vcmp.lt.s32.totalorder %v234, 16
    %vm243 = vcmp.lt.s32.totalorder %v235, 16
    %vm244 = vmand %vm236, %vm240
    %vm245 = vmand %vm237, %vm241
    %vm246 = vmand %vm238, %vm242
    %vm247 = vmand %vm239, %vm243
    %v248 = vadd.s32 %v220, 4294967295
    %v249 = vadd.s32 %v221, 4294967295
    %v250 = vadd.s32 %v222, 4294967295
    %v251 = vadd.s32 %v223, 4294967295
    %vm252 = vcmp.ge.s32.totalorder %v248, 0
    %vm253 = vcmp.ge.s32.totalorder %v249, 0
    %vm254 = vcmp.ge.s32.totalorder %v250, 0
    %vm255 = vcmp.ge.s32.totalorder %v251, 0
    %vm256 = vcmp.lt.s32.totalorder %v248, 16
    %vm257 = vcmp.lt.s32.totalorder %v249, 16
    %vm258 = vcmp.lt.s32.totalorder %v250, 16
    %vm259 = vcmp.lt.s32.totalorder %v251, 16
    %vm260 = vmand %vm252, %vm256
    %vm261 = vmand %vm253, %vm257
    %vm262 = vmand %vm254, %vm258
    %vm263 = vmand %vm255, %vm259
    %v264 = vadd.s32 %v220, 1
    %v265 = vadd.s32 %v221, 1
    %v266 = vadd.s32 %v222, 1
    %v267 = vadd.s32 %v223, 1
    %vm268 = vcmp.ge.s32.totalorder %v264, 0
    %vm269 = vcmp.ge.s32.totalorder %v265, 0
    %vm270 = vcmp.ge.s32.totalorder %v266, 0
    %vm271 = vcmp.ge.s32.totalorder %v267, 0
    %vm272 = vcmp.lt.s32.totalorder %v264, 16
    %vm273 = vcmp.lt.s32.totalorder %v265, 16
    %vm274 = vcmp.lt.s32.totalorder %v266, 16
    %vm275 = vcmp.lt.s32.totalorder %v267, 16
    %vm276 = vmand %vm268, %vm272
    %vm277 = vmand %vm269, %vm273
    %vm278 = vmand %vm270, %vm274
    %vm279 = vmand %vm271, %vm275
    %v280 = vadd.s32 %v220, 2
    %v281 = vadd.s32 %v221, 2
    %v282 = vadd.s32 %v222, 2
    %v283 = vadd.s32 %v223, 2
    %vm284 = vcmp.ge.s32.totalorder %v280, 0
    %vm285 = vcmp.ge.s32.totalorder %v281, 0
    %vm286 = vcmp.ge.s32.totalorder %v282, 0
    %vm287 = vcmp.ge.s32.totalorder %v283, 0
    %vm288 = vcmp.lt.s32.totalorder %v280, 16
    %vm289 = vcmp.lt.s32.totalorder %v281, 16
    %vm290 = vcmp.lt.s32.totalorder %v282, 16
    %vm291 = vcmp.lt.s32.totalorder %v283, 16
    %vm292 = vmand %vm284, %vm288
    %vm293 = vmand %vm285, %vm289
    %vm294 = vmand %vm286, %vm290
    %vm295 = vmand %vm287, %vm291
    %v296 = vadd.s32 %v228, 4294967294
    %v297 = vadd.s32 %v229, 4294967294
    %v298 = vadd.s32 %v230, 4294967294
    %v299 = vadd.s32 %v231, 4294967294
    %vm300 = vcmp.ge.s32.totalorder %v296, 0
    %vm301 = vcmp.ge.s32.totalorder %v297, 0
    %vm302 = vcmp.ge.s32.totalorder %v298, 0
    %vm303 = vcmp.ge.s32.totalorder %v299, 0
    %vm304 = vcmp.lt.s32.totalorder %v296, 16
    %vm305 = vcmp.lt.s32.totalorder %v297, 16
    %vm306 = vcmp.lt.s32.totalorder %v298, 16
    %vm307 = vcmp.lt.s32.totalorder %v299, 16
    %vm308 = vmand %vm300, %vm304
    %vm309 = vmand %vm301, %vm305
    %vm310 = vmand %vm302, %vm306
    %vm311 = vmand %vm303, %vm307
    %v312 = vadd.s32 %v228, 4294967295
    %v313 = vadd.s32 %v229, 4294967295
    %v314 = vadd.s32 %v230, 4294967295
    %v315 = vadd.s32 %v231, 4294967295
    %vm316 = vcmp.ge.s32.totalorder %v312, 0
    %vm317 = vcmp.ge.s32.totalorder %v313, 0
    %vm318 = vcmp.ge.s32.totalorder %v314, 0
    %vm319 = vcmp.ge.s32.totalorder %v315, 0
    %vm320 = vcmp.lt.s32.totalorder %v312, 16
    %vm321 = vcmp.lt.s32.totalorder %v313, 16
    %vm322 = vcmp.lt.s32.totalorder %v314, 16
    %vm323 = vcmp.lt.s32.totalorder %v315, 16
    %vm324 = vmand %vm316, %vm320
    %vm325 = vmand %vm317, %vm321
    %vm326 = vmand %vm318, %vm322
    %vm327 = vmand %vm319, %vm323
    %v328 = vadd.s32 %v228, 1
    %v329 = vadd.s32 %v229, 1
    %v330 = vadd.s32 %v230, 1
    %v331 = vadd.s32 %v231, 1
    %vm332 = vcmp.ge.s32.totalorder %v328, 0
    %vm333 = vcmp.ge.s32.totalorder %v329, 0
    %vm334 = vcmp.ge.s32.totalorder %v330, 0
    %vm335 = vcmp.ge.s32.totalorder %v331, 0
    %vm336 = vcmp.lt.s32.totalorder %v328, 16
    %vm337 = vcmp.lt.s32.totalorder %v329, 16
    %vm338 = vcmp.lt.s32.totalorder %v330, 16
    %vm339 = vcmp.lt.s32.totalorder %v331, 16
    %vm340 = vmand %vm332, %vm336
    %vm341 = vmand %vm333, %vm337
    %vm342 = vmand %vm334, %vm338
    %vm343 = vmand %vm335, %vm339
    %v344 = vadd.s32 %v228, 2
    %v345 = vadd.s32 %v229, 2
    %v346 = vadd.s32 %v230, 2
    %v347 = vadd.s32 %v231, 2
    %vm348 = vcmp.ge.s32.totalorder %v344, 0
    %vm349 = vcmp.ge.s32.totalorder %v345, 0
    %vm350 = vcmp.ge.s32.totalorder %v346, 0
    %vm351 = vcmp.ge.s32.totalorder %v347, 0
    %vm352 = vcmp.lt.s32.totalorder %v344, 16
    %vm353 = vcmp.lt.s32.totalorder %v345, 16
    %vm354 = vcmp.lt.s32.totalorder %v346, 16
    %vm355 = vcmp.lt.s32.totalorder %v347, 16
    %vm356 = vmand %vm348, %vm352
    %vm357 = vmand %vm349, %vm353
    %vm358 = vmand %vm350, %vm354
    %vm359 = vmand %vm351, %vm355
    %360 = vrot.lane.b32.xlu0 %v211, 2
    %v361 = vpop.permute.xlu0 %360
    %362 = vrot.lane.b32.xlu0 %v212, 2
    %v363 = vpop.permute.xlu0 %362
    %364 = vrot.lane.b32.xlu0 %v213, 2
    %v365 = vpop.permute.xlu0 %364
    %366 = vrot.lane.b32.xlu0 %v214, 2
    %v367 = vpop.permute.xlu0 %366
    %vm368 = vcmp.lt.s32.totalorder %v216, 2
    %v369 = vsel %vm368, %v365, %v367
    %v370 = vsel %vm368, %v363, %v365
    %v371 = vsel %vm368, %v361, %v363
    %v372 = vsel %vm368, %v367, %v361
    %v373 = vmax.f32 %v211, %v372
    %v374 = vmax.f32 %v212, %v371
    %v375 = vmax.f32 %v213, %v370
    %v376 = vmax.f32 %v214, %v369
    %v377 = vsel %vm244, %v373, %v211
    %v378 = vsel %vm245, %v374, %v212
    %v379 = vsel %vm246, %v375, %v213
    %v380 = vsel %vm247, %v376, %v214
    %381 = vrot.lane.b32.xlu0 %v211, 1
    %v382 = vpop.permute.xlu0 %381
    %383 = vrot.lane.b32.xlu0 %v212, 1
    %v384 = vpop.permute.xlu0 %383
    %385 = vrot.lane.b32.xlu0 %v213, 1
    %v386 = vpop.permute.xlu0 %385
    %387 = vrot.lane.b32.xlu0 %v214, 1
    %v388 = vpop.permute.xlu0 %387
    %vm389 = vcmp.lt.s32.totalorder %v216, 1
    %v390 = vsel %vm389, %v386, %v388
    %v391 = vsel %vm389, %v384, %v386
    %v392 = vsel %vm389, %v382, %v384
    %v393 = vsel %vm389, %v388, %v382
    %v394 = vmax.f32 %v377, %v393
    %v395 = vmax.f32 %v378, %v392
    %v396 = vmax.f32 %v379, %v391
    %v397 = vmax.f32 %v380, %v390
    %v398 = vsel %vm260, %v394, %v377
    %v399 = vsel %vm261, %v395, %v378
    %v400 = vsel %vm262, %v396, %v379
    %v401 = vsel %vm263, %v397, %v380
    %402 = vrot.lane.b32.xlu0 %v211, 127
    %v403 = vpop.permute.xlu0 %402
    %404 = vrot.lane.b32.xlu0 %v212, 127
    %v405 = vpop.permute.xlu0 %404
    %406 = vrot.lane.b32.xlu0 %v213, 127
    %v407 = vpop.permute.xlu0 %406
    %408 = vrot.lane.b32.xlu0 %v214, 127
    %v409 = vpop.permute.xlu0 %408
    %vm410 = vcmp.lt.s32.totalorder %v216, 127
    %v411 = vsel %vm410, %v407, %v409
    %v412 = vsel %vm410, %v405, %v407
    %v413 = vsel %vm410, %v403, %v405
    %v414 = vsel %vm410, %v409, %v403
    %v415 = vmax.f32 %v398, %v413
    %v416 = vmax.f32 %v399, %v412
    %v417 = vmax.f32 %v400, %v411
    %v418 = vmax.f32 %v401, %v414
    %v419 = vsel %vm276, %v415, %v398
    %v420 = vsel %vm277, %v416, %v399
    %v421 = vsel %vm278, %v417, %v400
    %v422 = vsel %vm279, %v418, %v401
    %423 = vrot.lane.b32.xlu0 %v211, 126
    %v424 = vpop.permute.xlu0 %423
    %425 = vrot.lane.b32.xlu0 %v212, 126
    %v426 = vpop.permute.xlu0 %425
    %427 = vrot.lane.b32.xlu0 %v213, 126
    %v428 = vpop.permute.xlu0 %427
    %429 = vrot.lane.b32.xlu0 %v214, 126
    %v430 = vpop.permute.xlu0 %429
    %vm431 = vcmp.lt.s32.totalorder %v216, 126
    %v432 = vsel %vm431, %v428, %v430
    %v433 = vsel %vm431, %v426, %v428
    %v434 = vsel %vm431, %v424, %v426
    %v435 = vsel %vm431, %v430, %v424
    %v436 = vmax.f32 %v419, %v434
    %v437 = vmax.f32 %v420, %v433
    %v438 = vmax.f32 %v421, %v432
    %v439 = vmax.f32 %v422, %v435
    %v440 = vsel %vm292, %v436, %v419
    %v441 = vsel %vm293, %v437, %v420
    %v442 = vsel %vm294, %v438, %v421
    %v443 = vsel %vm295, %v439, %v422
    %444 = vrot.lane.b32.xlu0 %v440, 32
    %v445 = vpop.permute.xlu0 %444
    %446 = vrot.lane.b32.xlu0 %v441, 32
    %v447 = vpop.permute.xlu0 %446
    %448 = vrot.lane.b32.xlu0 %v442, 32
    %v449 = vpop.permute.xlu0 %448
    %450 = vrot.lane.b32.xlu0 %v443, 32
    %v451 = vpop.permute.xlu0 %450
    %vm452 = vcmp.lt.s32.totalorder %v216, 32
    %v453 = vsel %vm452, %v449, %v451
    %v454 = vsel %vm452, %v447, %v449
    %v455 = vsel %vm452, %v445, %v447
    %v456 = vsel %vm452, %v451, %v445
    %v457 = vmax.f32 %v440, %v456
    %v458 = vmax.f32 %v441, %v455
    %v459 = vmax.f32 %v442, %v454
    %v460 = vmax.f32 %v443, %v453
    %v461 = vsel %vm308, %v457, %v440
    %v462 = vsel %vm309, %v458, %v441
    %v463 = vsel %vm310, %v459, %v442
    %v464 = vsel %vm311, %v460, %v443
    %465 = vrot.lane.b32.xlu0 %v440, 16
    %v466 = vpop.permute.xlu0 %465
    %467 = vrot.lane.b32.xlu0 %v441, 16
    %v468 = vpop.permute.xlu0 %467
    %469 = vrot.lane.b32.xlu0 %v442, 16
    %v470 = vpop.permute.xlu0 %469
    %471 = vrot.lane.b32.xlu0 %v443, 16
    %v472 = vpop.permute.xlu0 %471
    %vm473 = vcmp.lt.s32.totalorder %v216, 16
    %v474 = vsel %vm473, %v470, %v472
    %v475 = vsel %vm473, %v468, %v470
    %v476 = vsel %vm473, %v466, %v468
    %v477 = vsel %vm473, %v472, %v466
    %v478 = vmax.f32 %v461, %v477
    %v479 = vmax.f32 %v462, %v476
    %v480 = vmax.f32 %v463, %v475
    %v481 = vmax.f32 %v464, %v474
    %v482 = vsel %vm324, %v478, %v461
    %v483 = vsel %vm325, %v479, %v462
    %v484 = vsel %vm326, %v480, %v463
    %v485 = vsel %vm327, %v481, %v464
    %486 = vrot.lane.b32.xlu0 %v440, 112
    %v487 = vpop.permute.xlu0 %486
    %488 = vrot.lane.b32.xlu0 %v441, 112
    %v489 = vpop.permute.xlu0 %488
    %490 = vrot.lane.b32.xlu0 %v442, 112
    %v491 = vpop.permute.xlu0 %490
    %492 = vrot.lane.b32.xlu0 %v443, 112
    %v493 = vpop.permute.xlu0 %492
    %vm494 = vcmp.lt.s32.totalorder %v216, 112
    %v495 = vsel %vm494, %v491, %v493
    %v496 = vsel %vm494, %v489, %v491
    %v497 = vsel %vm494, %v487, %v489
    %v498 = vsel %vm494, %v493, %v487
    %v499 = vmax.f32 %v482, %v497
    %v500 = vmax.f32 %v483, %v496
    %v501 = vmax.f32 %v484, %v495
    %v502 = vmax.f32 %v485, %v498
    %v503 = vsel %vm340, %v499, %v482
    %v504 = vsel %vm341, %v500, %v483
    %v505 = vsel %vm342, %v501, %v484
    %v506 = vsel %vm343, %v502, %v485
    %507 = vrot.lane.b32.xlu0 %v440, 96
    %v508 = vpop.permute.xlu0 %507
    %509 = vrot.lane.b32.xlu0 %v441, 96
    %v510 = vpop.permute.xlu0 %509
    %511 = vrot.lane.b32.xlu0 %v442, 96
    %v512 = vpop.permute.xlu0 %511
    %513 = vrot.lane.b32.xlu0 %v443, 96
    %v514 = vpop.permute.xlu0 %513
    %vm515 = vcmp.lt.s32.totalorder %v216, 96
    %v516 = vsel %vm515, %v512, %v514
    %v517 = vsel %vm515, %v510, %v512
    %v518 = vsel %vm515, %v508, %v510
    %v519 = vsel %vm515, %v514, %v508
    %v520 = vmax.f32 %v503, %v518
    %v521 = vmax.f32 %v504, %v517
    %v522 = vmax.f32 %v505, %v516
    %v523 = vmax.f32 %v506, %v519
    %v524 = vsel %vm356, %v520, %v503
    %v525 = vsel %vm357, %v521, %v504
    %v526 = vsel %vm358, %v522, %v505
    %v527 = vsel %vm359, %v523, %v506
    %528 = vrot.lane.b32.xlu0 %v524, 2
    %v529 = vpop.permute.xlu0 %528
    %530 = vrot.lane.b32.xlu0 %v525, 2
    %v531 = vpop.permute.xlu0 %530
    %532 = vrot.lane.b32.xlu0 %v526, 2
    %v533 = vpop.permute.xlu0 %532
    %534 = vrot.lane.b32.xlu0 %v527, 2
    %v535 = vpop.permute.xlu0 %534
    %v536 = vsel %vm368, %v533, %v535
    %v537 = vsel %vm368, %v531, %v533
    %v538 = vsel %vm368, %v529, %v531
    %v539 = vsel %vm368, %v535, %v529
    %v540 = vmax.f32 %v524, %v539
    %v541 = vmax.f32 %v525, %v538
    %v542 = vmax.f32 %v526, %v537
    %v543 = vmax.f32 %v527, %v536
    %v544 = vsel %vm244, %v540, %v524
    %v545 = vsel %vm245, %v541, %v525
    %v546 = vsel %vm246, %v542, %v526
    %v547 = vsel %vm247, %v543, %v527
    %548 = vrot.lane.b32.xlu0 %v524, 1
    %v549 = vpop.permute.xlu0 %548
    %550 = vrot.lane.b32.xlu0 %v525, 1
    %v551 = vpop.permute.xlu0 %550
    %552 = vrot.lane.b32.xlu0 %v526, 1
    %v553 = vpop.permute.xlu0 %552
    %554 = vrot.lane.b32.xlu0 %v527, 1
    %v555 = vpop.permute.xlu0 %554
    %v556 = vsel %vm389, %v553, %v555
    %v557 = vsel %vm389, %v551, %v553
    %v558 = vsel %vm389, %v549, %v551
    %v559 = vsel %vm389, %v555, %v549
    %v560 = vmax.f32 %v544, %v559
    %v561 = vmax.f32 %v545, %v558
    %v562 = vmax.f32 %v546, %v557
    %v563 = vmax.f32 %v547, %v556
    %v564 = vsel %vm260, %v560, %v544
    %v565 = vsel %vm261, %v561, %v545
    %v566 = vsel %vm262, %v562, %v546
    %v567 = vsel %vm263, %v563, %v547
    %568 = vrot.lane.b32.xlu0 %v524, 127
    %v569 = vpop.permute.xlu0 %568
    %570 = vrot.lane.b32.xlu0 %v525, 127
    %v571 = vpop.permute.xlu0 %570
    %572 = vrot.lane.b32.xlu0 %v526, 127
    %v573 = vpop.permute.xlu0 %572
    %574 = vrot.lane.b32.xlu0 %v527, 127
    %v575 = vpop.permute.xlu0 %574
    %v576 = vsel %vm410, %v573, %v575
    %v577 = vsel %vm410, %v571, %v573
    %v578 = vsel %vm410, %v569, %v571
    %v579 = vsel %vm410, %v575, %v569
    %v580 = vmax.f32 %v564, %v578
    %v581 = vmax.f32 %v565, %v577
    %v582 = vmax.f32 %v566, %v576
    %v583 = vmax.f32 %v567, %v579
    %v584 = vsel %vm276, %v580, %v564
    %v585 = vsel %vm277, %v581, %v565
    %v586 = vsel %vm278, %v582, %v566
    %v587 = vsel %vm279, %v583, %v567
    %588 = vrot.lane.b32.xlu0 %v524, 126
    %v589 = vpop.permute.xlu0 %588
    %590 = vrot.lane.b32.xlu0 %v525, 126
    %v591 = vpop.permute.xlu0 %590
    %592 = vrot.lane.b32.xlu0 %v526, 126
    %v593 = vpop.permute.xlu0 %592
    %594 = vrot.lane.b32.xlu0 %v527, 126
    %v595 = vpop.permute.xlu0 %594
    %v596 = vsel %vm431, %v593, %v595
    %v597 = vsel %vm431, %v591, %v593
    %v598 = vsel %vm431, %v589, %v591
    %v599 = vsel %vm431, %v595, %v589
    %v600 = vmax.f32 %v584, %v598
    %v601 = vmax.f32 %v585, %v597
    %v602 = vmax.f32 %v586, %v596
    %v603 = vmax.f32 %v587, %v599
    %v604 = vsel %vm292, %v600, %v584
    %v605 = vsel %vm293, %v601, %v585
    %v606 = vsel %vm294, %v602, %v586
    %v607 = vsel %vm295, %v603, %v587
    %608 = vrot.lane.b32.xlu0 %v604, 32
    %v609 = vpop.permute.xlu0 %608
    %610 = vrot.lane.b32.xlu0 %v605, 32
    %v611 = vpop.permute.xlu0 %610
    %612 = vrot.lane.b32.xlu0 %v606, 32
    %v613 = vpop.permute.xlu0 %612
    %614 = vrot.lane.b32.xlu0 %v607, 32
    %v615 = vpop.permute.xlu0 %614
    %v616 = vsel %vm452, %v613, %v615
    %v617 = vsel %vm452, %v611, %v613
    %v618 = vsel %vm452, %v609, %v611
    %v619 = vsel %vm452, %v615, %v609
    %v620 = vmax.f32 %v604, %v619
    %v621 = vmax.f32 %v605, %v618
    %v622 = vmax.f32 %v606, %v617
    %v623 = vmax.f32 %v607, %v616
    %v624 = vsel %vm308, %v620, %v604
    %v625 = vsel %vm309, %v621, %v605
    %v626 = vsel %vm310, %v622, %v606
    %v627 = vsel %vm311, %v623, %v607
    %628 = vrot.lane.b32.xlu0 %v604, 16
    %v629 = vpop.permute.xlu0 %628
    %630 = vrot.lane.b32.xlu0 %v605, 16
    %v631 = vpop.permute.xlu0 %630
    %632 = vrot.lane.b32.xlu0 %v606, 16
    %v633 = vpop.permute.xlu0 %632
    %634 = vrot.lane.b32.xlu0 %v607, 16
    %v635 = vpop.permute.xlu0 %634
    %v636 = vsel %vm473, %v633, %v635
    %v637 = vsel %vm473, %v631, %v633
    %v638 = vsel %vm473, %v629, %v631
    %v639 = vsel %vm473, %v635, %v629
    %v640 = vmax.f32 %v624, %v639
    %v641 = vmax.f32 %v625, %v638
    %v642 = vmax.f32 %v626, %v637
    %v643 = vmax.f32 %v627, %v636
    %v644 = vsel %vm324, %v640, %v624
    %v645 = vsel %vm325, %v641, %v625
    %v646 = vsel %vm326, %v642, %v626
    %v647 = vsel %vm327, %v643, %v627
    %648 = vrot.lane.b32.xlu0 %v604, 112
    %v649 = vpop.permute.xlu0 %648
    %650 = vrot.lane.b32.xlu0 %v605, 112
    %v651 = vpop.permute.xlu0 %650
    %652 = vrot.lane.b32.xlu0 %v606, 112
    %v653 = vpop.permute.xlu0 %652
    %654 = vrot.lane.b32.xlu0 %v607, 112
    %v655 = vpop.permute.xlu0 %654
    %v656 = vsel %vm494, %v653, %v655
    %v657 = vsel %vm494, %v651, %v653
    %v658 = vsel %vm494, %v649, %v651
    %v659 = vsel %vm494, %v655, %v649
    %v660 = vmax.f32 %v644, %v658
    %v661 = vmax.f32 %v645, %v657
    %v662 = vmax.f32 %v646, %v656
    %v663 = vmax.f32 %v647, %v659
    %v664 = vsel %vm340, %v660, %v644
    %v665 = vsel %vm341, %v661, %v645
    %v666 = vsel %vm342, %v662, %v646
    %v667 = vsel %vm343, %v663, %v647
    %668 = vrot.lane.b32.xlu0 %v604, 96
    %v669 = vpop.permute.xlu0 %668
    %670 = vrot.lane.b32.xlu0 %v605, 96
    %v671 = vpop.permute.xlu0 %670
    %672 = vrot.lane.b32.xlu0 %v606, 96
    %v673 = vpop.permute.xlu0 %672
    %674 = vrot.lane.b32.xlu0 %v607, 96
    %v675 = vpop.permute.xlu0 %674
    %v676 = vsel %vm515, %v673, %v675
    %v677 = vsel %vm515, %v671, %v673
    %v678 = vsel %vm515, %v669, %v671
    %v679 = vsel %vm515, %v675, %v669
    %v680 = vmax.f32 %v664, %v678
    %v681 = vmax.f32 %v665, %v677
    %v682 = vmax.f32 %v666, %v676
    %v683 = vmax.f32 %v667, %v679
    %v684 = vsel %vm356, %v680, %v664
    %v685 = vsel %vm357, %v681, %v665
    %v686 = vsel %vm358, %v682, %v666
    %v687 = vsel %vm359, %v683, %v667
    %688 = vrot.lane.b32.xlu0 %v684, 2
    %v689 = vpop.permute.xlu0 %688
    %690 = vrot.lane.b32.xlu0 %v685, 2
    %v691 = vpop.permute.xlu0 %690
    %692 = vrot.lane.b32.xlu0 %v686, 2
    %v693 = vpop.permute.xlu0 %692
    %694 = vrot.lane.b32.xlu0 %v687, 2
    %v695 = vpop.permute.xlu0 %694
    %v696 = vsel %vm368, %v693, %v695
    %v697 = vsel %vm368, %v691, %v693
    %v698 = vsel %vm368, %v689, %v691
    %v699 = vsel %vm368, %v695, %v689
    %v700 = vmax.f32 %v684, %v699
    %v701 = vmax.f32 %v685, %v698
    %v702 = vmax.f32 %v686, %v697
    %v703 = vmax.f32 %v687, %v696
    %v704 = vsel %vm244, %v700, %v684
    %v705 = vsel %vm245, %v701, %v685
    %v706 = vsel %vm246, %v702, %v686
    %v707 = vsel %vm247, %v703, %v687
    %708 = vrot.lane.b32.xlu0 %v684, 1
    %v709 = vpop.permute.xlu0 %708
    %710 = vrot.lane.b32.xlu0 %v685, 1
    %v711 = vpop.permute.xlu0 %710
    %712 = vrot.lane.b32.xlu0 %v686, 1
    %v713 = vpop.permute.xlu0 %712
    %714 = vrot.lane.b32.xlu0 %v687, 1
    %v715 = vpop.permute.xlu0 %714
    %v716 = vsel %vm389, %v713, %v715
    %v717 = vsel %vm389, %v711, %v713
    %v718 = vsel %vm389, %v709, %v711
    %v719 = vsel %vm389, %v715, %v709
    %v720 = vmax.f32 %v704, %v719
    %v721 = vmax.f32 %v705, %v718
    %v722 = vmax.f32 %v706, %v717
    %v723 = vmax.f32 %v707, %v716
    %v724 = vsel %vm260, %v720, %v704
    %v725 = vsel %vm261, %v721, %v705
    %v726 = vsel %vm262, %v722, %v706
    %v727 = vsel %vm263, %v723, %v707
    %728 = vrot.lane.b32.xlu0 %v684, 127
    %v729 = vpop.permute.xlu0 %728
    %730 = vrot.lane.b32.xlu0 %v685, 127
    %v731 = vpop.permute.xlu0 %730
    %732 = vrot.lane.b32.xlu0 %v686, 127
    %v733 = vpop.permute.xlu0 %732
    %734 = vrot.lane.b32.xlu0 %v687, 127
    %v735 = vpop.permute.xlu0 %734
    %v736 = vsel %vm410, %v733, %v735
    %v737 = vsel %vm410, %v731, %v733
    %v738 = vsel %vm410, %v729, %v731
    %v739 = vsel %vm410, %v735, %v729
    %v740 = vmax.f32 %v724, %v738
    %v741 = vmax.f32 %v725, %v737
    %v742 = vmax.f32 %v726, %v736
    %v743 = vmax.f32 %v727, %v739
    %v744 = vsel %vm276, %v740, %v724
    %v745 = vsel %vm277, %v741, %v725
    %v746 = vsel %vm278, %v742, %v726
    %v747 = vsel %vm279, %v743, %v727
    %748 = vrot.lane.b32.xlu0 %v684, 126
    %v749 = vpop.permute.xlu0 %748
    %750 = vrot.lane.b32.xlu0 %v685, 126
    %v751 = vpop.permute.xlu0 %750
    %752 = vrot.lane.b32.xlu0 %v686, 126
    %v753 = vpop.permute.xlu0 %752
    %754 = vrot.lane.b32.xlu0 %v687, 126
    %v755 = vpop.permute.xlu0 %754
    %v756 = vsel %vm431, %v753, %v755
    %v757 = vsel %vm431, %v751, %v753
    %v758 = vsel %vm431, %v749, %v751
    %v759 = vsel %vm431, %v755, %v749
    %v760 = vmax.f32 %v744, %v758
    %v761 = vmax.f32 %v745, %v757
    %v762 = vmax.f32 %v746, %v756
    %v763 = vmax.f32 %v747, %v759
    %v764 = vsel %vm292, %v760, %v744
    %v765 = vsel %vm293, %v761, %v745
    %v766 = vsel %vm294, %v762, %v746
    %v767 = vsel %vm295, %v763, %v747
    %768 = vrot.lane.b32.xlu0 %v764, 32
    %v769 = vpop.permute.xlu0 %768
    %770 = vrot.lane.b32.xlu0 %v765, 32
    %v771 = vpop.permute.xlu0 %770
    %772 = vrot.lane.b32.xlu0 %v766, 32
    %v773 = vpop.permute.xlu0 %772
    %774 = vrot.lane.b32.xlu0 %v767, 32
    %v775 = vpop.permute.xlu0 %774
    %v776 = vsel %vm452, %v773, %v775
    %v777 = vsel %vm452, %v771, %v773
    %v778 = vsel %vm452, %v769, %v771
    %v779 = vsel %vm452, %v775, %v769
    %v780 = vmax.f32 %v764, %v779
    %v781 = vmax.f32 %v765, %v778
    %v782 = vmax.f32 %v766, %v777
    %v783 = vmax.f32 %v767, %v776
    %v784 = vsel %vm308, %v780, %v764
    %v785 = vsel %vm309, %v781, %v765
    %v786 = vsel %vm310, %v782, %v766
    %v787 = vsel %vm311, %v783, %v767
    %788 = vrot.lane.b32.xlu0 %v764, 16
    %v789 = vpop.permute.xlu0 %788
    %790 = vrot.lane.b32.xlu0 %v765, 16
    %v791 = vpop.permute.xlu0 %790
    %792 = vrot.lane.b32.xlu0 %v766, 16
    %v793 = vpop.permute.xlu0 %792
    %794 = vrot.lane.b32.xlu0 %v767, 16
    %v795 = vpop.permute.xlu0 %794
    %v796 = vsel %vm473, %v793, %v795
    %v797 = vsel %vm473, %v791, %v793
    %v798 = vsel %vm473, %v789, %v791
    %v799 = vsel %vm473, %v795, %v789
    %v800 = vmax.f32 %v784, %v799
    %v801 = vmax.f32 %v785, %v798
    %v802 = vmax.f32 %v786, %v797
    %v803 = vmax.f32 %v787, %v796
    %v804 = vsel %vm324, %v800, %v784
    %v805 = vsel %vm325, %v801, %v785
    %v806 = vsel %vm326, %v802, %v786
    %v807 = vsel %vm327, %v803, %v787
    %808 = vrot.lane.b32.xlu0 %v764, 112
    %v809 = vpop.permute.xlu0 %808
    %810 = vrot.lane.b32.xlu0 %v765, 112
    %v811 = vpop.permute.xlu0 %810
    %812 = vrot.lane.b32.xlu0 %v766, 112
    %v813 = vpop.permute.xlu0 %812
    %814 = vrot.lane.b32.xlu0 %v767, 112
    %v815 = vpop.permute.xlu0 %814
    %v816 = vsel %vm494, %v813, %v815
    %v817 = vsel %vm494, %v811, %v813
    %v818 = vsel %vm494, %v809, %v811
    %v819 = vsel %vm494, %v815, %v809
    %v820 = vmax.f32 %v804, %v818
    %v821 = vmax.f32 %v805, %v817
    %v822 = vmax.f32 %v806, %v816
    %v823 = vmax.f32 %v807, %v819
    %v824 = vsel %vm340, %v820, %v804
    %v825 = vsel %vm341, %v821, %v805
    %v826 = vsel %vm342, %v822, %v806
    %v827 = vsel %vm343, %v823, %v807
    %828 = vrot.lane.b32.xlu0 %v764, 96
    %v829 = vpop.permute.xlu0 %828
    %830 = vrot.lane.b32.xlu0 %v765, 96
    %v831 = vpop.permute.xlu0 %830
    %832 = vrot.lane.b32.xlu0 %v766, 96
    %v833 = vpop.permute.xlu0 %832
    %834 = vrot.lane.b32.xlu0 %v767, 96
    %v835 = vpop.permute.xlu0 %834
    %v836 = vsel %vm515, %v833, %v835
    %v837 = vsel %vm515, %v831, %v833
    %v838 = vsel %vm515, %v829, %v831
    %v839 = vsel %vm515, %v835, %v829
    %v840 = vmax.f32 %v824, %v838
    %v841 = vmax.f32 %v825, %v837
    %v842 = vmax.f32 %v826, %v836
    %v843 = vmax.f32 %v827, %v839
    %v844 = vsel %vm356, %v840, %v824
    %v845 = vsel %vm357, %v841, %v825
    %v846 = vsel %vm358, %v842, %v826
    %v847 = vsel %vm359, %v843, %v827
    %v848 = vld [vmem:[%s3] sm:$0xff]
    %v849 = vld [vmem:[%s3 + $0x8] sm:$0xff]
    %v850 = vld [vmem:[%s4] sm:$0xff]
    %v851 = vld [vmem:[%s4 + $0x8] sm:$0xff]
    %vm852 = vcmask 31744
    %v854 = vsel %vm852, %v850, 0
    %v857 = vsel %vm852, %v851, 0
    %vm859 = vcmask 1043456
    %v861 = vsel %vm859, %v524, 0
    %v864 = vsel %vm859, %v525, 0
    %v867 = vsel %vm859, %v526, 0
    %v870 = vsel %vm859, %v527, 0
    %872 = vmatprep.subr.mxu0 %v864
    %873 = vmatpush1.msra.mxu0 %v861
    %874 = vmatprep.subr.mxu0 0.0
    %875 = vmatpush1.msra.mxu0 0.0
    %876 = vmatprep.subr.mxu0 0.0
    %877 = vmatpush1.msra.mxu0 0.0
    %878 = vmatprep.subr.mxu0 0.0
    %879 = vmatpush1.msra.mxu0 0.0
    %880 = vmatprep.subr.mxu0 0.0
    %881 = vmatpush1.msra.mxu0 0.0
    %882 = vmatprep.subr.mxu0 0.0
    %883 = vmatpush1.msra.mxu0 0.0
    %884 = vmatprep.subr.mxu0 0.0
    %885 = vmatpush1.msra.mxu0 0.0
    %886 = vmatprep.subr.mxu0 0.0
    %887 = vmatpush1.msra.mxu0 0.0
    %888 = vmatprep.subr.mxu0 0.0
    %889 = vmatpush1.msra.mxu0 0.0
    %890 = vmatprep.subr.mxu0 0.0
    %891 = vmatpush1.msra.mxu0 0.0
    %892 = vmatprep.subr.mxu0 0.0
    %893 = vmatpush1.msra.mxu0 0.0
    %894 = vmatprep.subr.mxu0 0.0
    %895 = vmatpush1.msra.mxu0 0.0
    %896 = vmatprep.subr.mxu0 0.0
    %897 = vmatpush1.msra.mxu0 0.0
    %898 = vmatprep.subr.mxu0 0.0
    %899 = vmatpush1.msra.mxu0 0.0
    %900 = vmatprep.subr.mxu0 0.0
    %901 = vmatpush1.msra.mxu0 0.0
    %902 = vmatprep.subr.mxu0 0.0
    %903 = vmatpush1.msra.mxu0 0.0
    %904 = vmatprep.subr.mxu0 0.0
    %905 = vmatpush1.msra.mxu0 0.0
    %906 = vmatprep.subr.mxu0 0.0
    %907 = vmatpush1.msra.mxu0 0.0
    %908 = vmatprep.subr.mxu0 0.0
    %909 = vmatpush1.msra.mxu0 0.0
    %910 = vmatprep.subr.mxu0 0.0
    %911 = vmatpush1.msra.mxu0 0.0
    %912 = vmatprep.subr.mxu0 0.0
    %913 = vmatpush1.msra.mxu0 0.0
    %914 = vmatprep.subr.mxu0 0.0
    %915 = vmatpush1.msra.mxu0 0.0
    %916 = vmatprep.subr.mxu0 0.0
    %917 = vmatpush1.msra.mxu0 0.0
    %918 = vmatprep.subr.mxu0 0.0
    %919 = vmatpush1.msra.mxu0 0.0
    %920 = vmatprep.subr.mxu0 0.0
    %921 = vmatpush1.msra.mxu0 0.0
    %922 = vmatprep.subr.mxu0 0.0
    %923 = vmatpush1.msra.mxu0 0.0
    %924 = vmatprep.subr.mxu0 0.0
    %925 = vmatpush1.msra.mxu0 0.0
    %926 = vmatprep.subr.mxu0 0.0
    %927 = vmatpush1.msra.mxu0 0.0
    %928 = vmatprep.subr.mxu0 0.0
    %929 = vmatpush1.msra.mxu0 0.0
    %930 = vmatprep.subr.mxu0 0.0
    %931 = vmatpush1.msra.mxu0 0.0
    %932 = vmatprep.subr.mxu0 0.0
    %933 = vmatpush1.msra.mxu0 0.0
    %934 = vmatprep.subr.mxu0 0.0
    %935 = vmatpush1.msra.mxu0 0.0
    %936 = vmatprep.mubr.f32.mxu0 0.0
    %937 = vmatmul.mubr.f32.gmra.mrb[0].mxu0 %v854
    %v938 = vpop.f32.mrb[0].mxu0
    %v939 = vadd.f32 0.0, %v938
    %v940 = vpop.f32.mrb[0].mxu0
    %v941 = vadd.f32 0.0, %v940
    %942 = vmatprep.mubr.f32.mxu0 0.0
    %943 = vmatmul.mubr.f32.gmra.mrb[0].mxu0 %v857
    %v944 = vpop.f32.mrb[0].mxu0
    %v945 = vadd.f32 0.0, %v944
    %v946 = vpop.f32.mrb[0].mxu0
    %v947 = vadd.f32 0.0, %v946
    %948 = vdwg.mxu0
    %949 = vmatprep.subr.mxu0 %v870
    %950 = vmatpush1.msra.mxu0 %v867
    %951 = vmatprep.subr.mxu0 0.0
    %952 = vmatpush1.msra.mxu0 0.0
    %953 = vmatprep.subr.mxu0 0.0
    %954 = vmatpush1.msra.mxu0 0.0
    %955 = vmatprep.subr.mxu0 0.0
    %956 = vmatpush1.msra.mxu0 0.0
    %957 = vmatprep.subr.mxu0 0.0
    %958 = vmatpush1.msra.mxu0 0.0
    %959 = vmatprep.subr.mxu0 0.0
    %960 = vmatpush1.msra.mxu0 0.0
    %961 = vmatprep.subr.mxu0 0.0
    %962 = vmatpush1.msra.mxu0 0.0
    %963 = vmatprep.subr.mxu0 0.0
    %964 = vmatpush1.msra.mxu0 0.0
    %965 = vmatprep.subr.mxu0 0.0
    %966 = vmatpush1.msra.mxu0 0.0
    %967 = vmatprep.subr.mxu0 0.0
    %968 = vmatpush1.msra.mxu0 0.0
    %969 = vmatprep.subr.mxu0 0.0
    %970 = vmatpush1.msra.mxu0 0.0
    %971 = vmatprep.subr.mxu0 0.0
    %972 = vmatpush1.msra.mxu0 0.0
    %973 = vmatprep.subr.mxu0 0.0
    %974 = vmatpush1.msra.mxu0 0.0
    %975 = vmatprep.subr.mxu0 0.0
    %976 = vmatpush1.msra.mxu0 0.0
    %977 = vmatprep.subr.mxu0 0.0
    %978 = vmatpush1.msra.mxu0 0.0
    %979 = vmatprep.subr.mxu0 0.0
    %980 = vmatpush1.msra.mxu0 0.0
    %981 = vmatprep.subr.mxu0 0.0
    %982 = vmatpush1.msra.mxu0 0.0
    %983 = vmatprep.subr.mxu0 0.0
    %984 = vmatpush1.msra.mxu0 0.0
    %985 = vmatprep.subr.mxu0 0.0
    %986 = vmatpush1.msra.mxu0 0.0
    %987 = vmatprep.subr.mxu0 0.0
    %988 = vmatpush1.msra.mxu0 0.0
    %989 = vmatprep.subr.mxu0 0.0
    %990 = vmatpush1.msra.mxu0 0.0
    %991 = vmatprep.subr.mxu0 0.0
    %992 = vmatpush1.msra.mxu0 0.0
    %993 = vmatprep.subr.mxu0 0.0
    %994 = vmatpush1.msra.mxu0 0.0
    %995 = vmatprep.subr.mxu0 0.0
    %996 = vmatpush1.msra.mxu0 0.0
    %997 = vmatprep.subr.mxu0 0.0
    %998 = vmatpush1.msra.mxu0 0.0
    %999 = vmatprep.subr.mxu0 0.0
    %1000 = vmatpush1.msra.mxu0 0.0
    %1001 = vmatprep.subr.mxu0 0.0
    %1002 = vmatpush1.msra.mxu0 0.0
    %1003 = vmatprep.subr.mxu0 0.0
    %1004 = vmatpush1.msra.mxu0 0.0
    %1005 = vmatprep.subr.mxu0 0.0
    %1006 = vmatpush1.msra.mxu0 0.0
    %1007 = vmatprep.subr.mxu0 0.0
    %1008 = vmatpush1.msra.mxu0 0.0
    %1009 = vmatprep.subr.mxu0 0.0
    %1010 = vmatpush1.msra.mxu0 0.0
    %1011 = vmatprep.subr.mxu0 0.0
    %1012 = vmatpush1.msra.mxu0 0.0
    %1013 = vmatprep.mubr.f32.mxu0 0.0
    %1014 = vmatmul.mubr.f32.gmra.mrb[0].mxu0 %v854
    %v1015 = vpop.f32.mrb[0].mxu0
    %v1016 = vadd.f32 0.0, %v1015
    %v1017 = vpop.f32.mrb[0].mxu0
    %v1018 = vadd.f32 0.0, %v1017
    %1019 = vmatprep.mubr.f32.mxu0 0.0
    %1020 = vmatmul.mubr.f32.gmra.mrb[0].mxu0 %v857
    %v1021 = vpop.f32.mrb[0].mxu0
    %v1022 = vadd.f32 0.0, %v1021
    %v1023 = vpop.f32.mrb[0].mxu0
    %v1024 = vadd.f32 0.0, %v1023
    %1025 = vdwg.mxu0
    %v1027 = vsel %vm852, %v848, 0
    %v1030 = vsel %vm852, %v849, 0
    %v1033 = vsel %vm859, %v211, 0
    %v1036 = vsel %vm859, %v212, 0
    %v1039 = vsel %vm859, %v213, 0
    %v1042 = vsel %vm859, %v214, 0
    %1044 = vmatprep.subr.mxu0 %v1036
    %1045 = vmatpush1.msra.mxu0 %v1033
    %1046 = vmatprep.subr.mxu0 0.0
    %1047 = vmatpush1.msra.mxu0 0.0
    %1048 = vmatprep.subr.mxu0 0.0
    %1049 = vmatpush1.msra.mxu0 0.0
    %1050 = vmatprep.subr.mxu0 0.0
    %1051 = vmatpush1.msra.mxu0 0.0
    %1052 = vmatprep.subr.mxu0 0.0
    %1053 = vmatpush1.msra.mxu0 0.0
    %1054 = vmatprep.subr.mxu0 0.0
    %1055 = vmatpush1.msra.mxu0 0.0
    %1056 = vmatprep.subr.mxu0 0.0
    %1057 = vmatpush1.msra.mxu0 0.0
    %1058 = vmatprep.subr.mxu0 0.0
    %1059 = vmatpush1.msra.mxu0 0.0
    %1060 = vmatprep.subr.mxu0 0.0
    %1061 = vmatpush1.msra.mxu0 0.0
    %1062 = vmatprep.subr.mxu0 0.0
    %1063 = vmatpush1.msra.mxu0 0.0
    %1064 = vmatprep.subr.mxu0 0.0
    %1065 = vmatpush1.msra.mxu0 0.0
    %1066 = vmatprep.subr.mxu0 0.0
    %1067 = vmatpush1.msra.mxu0 0.0
    %1068 = vmatprep.subr.mxu0 0.0
    %1069 = vmatpush1.msra.mxu0 0.0
    %1070 = vmatprep.subr.mxu0 0.0
    %1071 = vmatpush1.msra.mxu0 0.0
    %1072 = vmatprep.subr.mxu0 0.0
    %1073 = vmatpush1.msra.mxu0 0.0
    %1074 = vmatprep.subr.mxu0 0.0
    %1075 = vmatpush1.msra.mxu0 0.0
    %1076 = vmatprep.subr.mxu0 0.0
    %1077 = vmatpush1.msra.mxu0 0.0
    %1078 = vmatprep.subr.mxu0 0.0
    %1079 = vmatpush1.msra.mxu0 0.0
    %1080 = vmatprep.subr.mxu0 0.0
    %1081 = vmatpush1.msra.mxu0 0.0
    %1082 = vmatprep.subr.mxu0 0.0
    %1083 = vmatpush1.msra.mxu0 0.0
    %1084 = vmatprep.subr.mxu0 0.0
    %1085 = vmatpush1.msra.mxu0 0.0
    %1086 = vmatprep.subr.mxu0 0.0
    %1087 = vmatpush1.msra.mxu0 0.0
    %1088 = vmatprep.subr.mxu0 0.0
    %1089 = vmatpush1.msra.mxu0 0.0
    %1090 = vmatprep.subr.mxu0 0.0
    %1091 = vmatpush1.msra.mxu0 0.0
    %1092 = vmatprep.subr.mxu0 0.0
    %1093 = vmatpush1.msra.mxu0 0.0
    %1094 = vmatprep.subr.mxu0 0.0
    %1095 = vmatpush1.msra.mxu0 0.0
    %1096 = vmatprep.subr.mxu0 0.0
    %1097 = vmatpush1.msra.mxu0 0.0
    %1098 = vmatprep.subr.mxu0 0.0
    %1099 = vmatpush1.msra.mxu0 0.0
    %1100 = vmatprep.subr.mxu0 0.0
    %1101 = vmatpush1.msra.mxu0 0.0
    %1102 = vmatprep.subr.mxu0 0.0
    %1103 = vmatpush1.msra.mxu0 0.0
    %1104 = vmatprep.subr.mxu0 0.0
    %1105 = vmatpush1.msra.mxu0 0.0
    %1106 = vmatprep.subr.mxu0 0.0
    %1107 = vmatpush1.msra.mxu0 0.0
    %1108 = vmatprep.mubr.f32.mxu0 0.0
    %1109 = vmatmul.mubr.f32.gmra.mrb[0].mxu0 %v1027
    %v1110 = vpop.f32.mrb[0].mxu0
    %v1111 = vadd.f32 %v939, %v1110
    %v1112 = vpop.f32.mrb[0].mxu0
    %v1113 = vadd.f32 %v941, %v1112
    %1114 = vmatprep.mubr.f32.mxu0 0.0
    %1115 = vmatmul.mubr.f32.gmra.mrb[0].mxu0 %v1030
    %v1116 = vpop.f32.mrb[0].mxu0
    %v1117 = vadd.f32 %v945, %v1116
    %v1118 = vpop.f32.mrb[0].mxu0
    %v1119 = vadd.f32 %v947, %v1118
    %1120 = vdwg.mxu0
    %1121 = vmatprep.subr.mxu0 %v1042
    %1122 = vmatpush1.msra.mxu0 %v1039
    %1123 = vmatprep.subr.mxu0 0.0
    %1124 = vmatpush1.msra.mxu0 0.0
    %1125 = vmatprep.subr.mxu0 0.0
    %1126 = vmatpush1.msra.mxu0 0.0
    %1127 = vmatprep.subr.mxu0 0.0
    %1128 = vmatpush1.msra.mxu0 0.0
    %1129 = vmatprep.subr.mxu0 0.0
    %1130 = vmatpush1.msra.mxu0 0.0
    %1131 = vmatprep.subr.mxu0 0.0
    %1132 = vmatpush1.msra.mxu0 0.0
    %1133 = vmatprep.subr.mxu0 0.0
    %1134 = vmatpush1.msra.mxu0 0.0
    %1135 = vmatprep.subr.mxu0 0.0
    %1136 = vmatpush1.msra.mxu0 0.0
    %1137 = vmatprep.subr.mxu0 0.0
    %1138 = vmatpush1.msra.mxu0 0.0
    %1139 = vmatprep.subr.mxu0 0.0
    %1140 = vmatpush1.msra.mxu0 0.0
    %1141 = vmatprep.subr.mxu0 0.0
    %1142 = vmatpush1.msra.mxu0 0.0
    %1143 = vmatprep.subr.mxu0 0.0
    %1144 = vmatpush1.msra.mxu0 0.0
    %1145 = vmatprep.subr.mxu0 0.0
    %1146 = vmatpush1.msra.mxu0 0.0
    %1147 = vmatprep.subr.mxu0 0.0
    %1148 = vmatpush1.msra.mxu0 0.0
    %1149 = vmatprep.subr.mxu0 0.0
    %1150 = vmatpush1.msra.mxu0 0.0
    %1151 = vmatprep.subr.mxu0 0.0
    %1152 = vmatpush1.msra.mxu0 0.0
    %1153 = vmatprep.subr.mxu0 0.0
    %1154 = vmatpush1.msra.mxu0 0.0
    %1155 = vmatprep.subr.mxu0 0.0
    %1156 = vmatpush1.msra.mxu0 0.0
    %1157 = vmatprep.subr.mxu0 0.0
    %1158 = vmatpush1.msra.mxu0 0.0
    %1159 = vmatprep.subr.mxu0 0.0
    %1160 = vmatpush1.msra.mxu0 0.0
    %1161 = vmatprep.subr.mxu0 0.0
    %1162 = vmatpush1.msra.mxu0 0.0
    %1163 = vmatprep.subr.mxu0 0.0
    %1164 = vmatpush1.msra.mxu0 0.0
    %1165 = vmatprep.subr.mxu0 0.0
    %1166 = vmatpush1.msra.mxu0 0.0
    %1167 = vmatprep.subr.mxu0 0.0
    %1168 = vmatpush1.msra.mxu0 0.0
    %1169 = vmatprep.subr.mxu0 0.0
    %1170 = vmatpush1.msra.mxu0 0.0
    %1171 = vmatprep.subr.mxu0 0.0
    %1172 = vmatpush1.msra.mxu0 0.0
    %1173 = vmatprep.subr.mxu0 0.0
    %1174 = vmatpush1.msra.mxu0 0.0
    %1175 = vmatprep.subr.mxu0 0.0
    %1176 = vmatpush1.msra.mxu0 0.0
    %1177 = vmatprep.subr.mxu0 0.0
    %1178 = vmatpush1.msra.mxu0 0.0
    %1179 = vmatprep.subr.mxu0 0.0
    %1180 = vmatpush1.msra.mxu0 0.0
    %1181 = vmatprep.subr.mxu0 0.0
    %1182 = vmatpush1.msra.mxu0 0.0
    %1183 = vmatprep.subr.mxu0 0.0
    %1184 = vmatpush1.msra.mxu0 0.0
    %1185 = vmatprep.mubr.f32.mxu0 0.0
    %1186 = vmatmul.mubr.f32.gmra.mrb[0].mxu0 %v1027
    %v1187 = vpop.f32.mrb[0].mxu0
    %v1188 = vadd.f32 %v1016, %v1187
    %v1189 = vpop.f32.mrb[0].mxu0
    %v1190 = vadd.f32 %v1018, %v1189
    %1191 = vmatprep.mubr.f32.mxu0 0.0
    %1192 = vmatmul.mubr.f32.gmra.mrb[0].mxu0 %v1030
    %v1193 = vpop.f32.mrb[0].mxu0
    %v1194 = vadd.f32 %v1022, %v1193
    %v1195 = vpop.f32.mrb[0].mxu0
    %v1196 = vadd.f32 %v1024, %v1195
    %1197 = vdwg.mxu0
    %v1198 = vld [vmem:[%s5] sm:$0xff]
    %v1199 = vld [vmem:[%s5 + $0x8] sm:$0xff]
    %v1201 = vsel %vm852, %v1198, 0
    %v1204 = vsel %vm852, %v1199, 0
    %v1207 = vsel %vm859, %v684, 0
    %v1210 = vsel %vm859, %v685, 0
    %v1213 = vsel %vm859, %v686, 0
    %v1216 = vsel %vm859, %v687, 0
    %1218 = vmatprep.subr.mxu0 %v1210
    %1219 = vmatpush1.msra.mxu0 %v1207
    %1220 = vmatprep.subr.mxu0 0.0
    %1221 = vmatpush1.msra.mxu0 0.0
    %1222 = vmatprep.subr.mxu0 0.0
    %1223 = vmatpush1.msra.mxu0 0.0
    %1224 = vmatprep.subr.mxu0 0.0
    %1225 = vmatpush1.msra.mxu0 0.0
    %1226 = vmatprep.subr.mxu0 0.0
    %1227 = vmatpush1.msra.mxu0 0.0
    %1228 = vmatprep.subr.mxu0 0.0
    %1229 = vmatpush1.msra.mxu0 0.0
    %1230 = vmatprep.subr.mxu0 0.0
    %1231 = vmatpush1.msra.mxu0 0.0
    %1232 = vmatprep.subr.mxu0 0.0
    %1233 = vmatpush1.msra.mxu0 0.0
    %1234 = vmatprep.subr.mxu0 0.0
    %1235 = vmatpush1.msra.mxu0 0.0
    %1236 = vmatprep.subr.mxu0 0.0
    %1237 = vmatpush1.msra.mxu0 0.0
    %1238 = vmatprep.subr.mxu0 0.0
    %1239 = vmatpush1.msra.mxu0 0.0
    %1240 = vmatprep.subr.mxu0 0.0
    %1241 = vmatpush1.msra.mxu0 0.0
    %1242 = vmatprep.subr.mxu0 0.0
    %1243 = vmatpush1.msra.mxu0 0.0
    %1244 = vmatprep.subr.mxu0 0.0
    %1245 = vmatpush1.msra.mxu0 0.0
    %1246 = vmatprep.subr.mxu0 0.0
    %1247 = vmatpush1.msra.mxu0 0.0
    %1248 = vmatprep.subr.mxu0 0.0
    %1249 = vmatpush1.msra.mxu0 0.0
    %1250 = vmatprep.subr.mxu0 0.0
    %1251 = vmatpush1.msra.mxu0 0.0
    %1252 = vmatprep.subr.mxu0 0.0
    %1253 = vmatpush1.msra.mxu0 0.0
    %1254 = vmatprep.subr.mxu0 0.0
    %1255 = vmatpush1.msra.mxu0 0.0
    %1256 = vmatprep.subr.mxu0 0.0
    %1257 = vmatpush1.msra.mxu0 0.0
    %1258 = vmatprep.subr.mxu0 0.0
    %1259 = vmatpush1.msra.mxu0 0.0
    %1260 = vmatprep.subr.mxu0 0.0
    %1261 = vmatpush1.msra.mxu0 0.0
    %1262 = vmatprep.subr.mxu0 0.0
    %1263 = vmatpush1.msra.mxu0 0.0
    %1264 = vmatprep.subr.mxu0 0.0
    %1265 = vmatpush1.msra.mxu0 0.0
    %1266 = vmatprep.subr.mxu0 0.0
    %1267 = vmatpush1.msra.mxu0 0.0
    %1268 = vmatprep.subr.mxu0 0.0
    %1269 = vmatpush1.msra.mxu0 0.0
    %1270 = vmatprep.subr.mxu0 0.0
    %1271 = vmatpush1.msra.mxu0 0.0
    %1272 = vmatprep.subr.mxu0 0.0
    %1273 = vmatpush1.msra.mxu0 0.0
    %1274 = vmatprep.subr.mxu0 0.0
    %1275 = vmatpush1.msra.mxu0 0.0
    %1276 = vmatprep.subr.mxu0 0.0
    %1277 = vmatpush1.msra.mxu0 0.0
    %1278 = vmatprep.subr.mxu0 0.0
    %1279 = vmatpush1.msra.mxu0 0.0
    %1280 = vmatprep.subr.mxu0 0.0
    %1281 = vmatpush1.msra.mxu0 0.0
    %1282 = vmatprep.mubr.f32.mxu0 0.0
    %1283 = vmatmul.mubr.f32.gmra.mrb[0].mxu0 %v1201
    %v1284 = vpop.f32.mrb[0].mxu0
    %v1285 = vadd.f32 0.0, %v1284
    %v1286 = vpop.f32.mrb[0].mxu0
    %v1287 = vadd.f32 0.0, %v1286
    %1288 = vmatprep.mubr.f32.mxu0 0.0
    %1289 = vmatmul.mubr.f32.gmra.mrb[0].mxu0 %v1204
    %v1290 = vpop.f32.mrb[0].mxu0
    %v1291 = vadd.f32 0.0, %v1290
    %v1292 = vpop.f32.mrb[0].mxu0
    %v1293 = vadd.f32 0.0, %v1292
    %1294 = vdwg.mxu0
    %1295 = vmatprep.subr.mxu0 %v1216
    %1296 = vmatpush1.msra.mxu0 %v1213
    %1297 = vmatprep.subr.mxu0 0.0
    %1298 = vmatpush1.msra.mxu0 0.0
    %1299 = vmatprep.subr.mxu0 0.0
    %1300 = vmatpush1.msra.mxu0 0.0
    %1301 = vmatprep.subr.mxu0 0.0
    %1302 = vmatpush1.msra.mxu0 0.0
    %1303 = vmatprep.subr.mxu0 0.0
    %1304 = vmatpush1.msra.mxu0 0.0
    %1305 = vmatprep.subr.mxu0 0.0
    %1306 = vmatpush1.msra.mxu0 0.0
    %1307 = vmatprep.subr.mxu0 0.0
    %1308 = vmatpush1.msra.mxu0 0.0
    %1309 = vmatprep.subr.mxu0 0.0
    %1310 = vmatpush1.msra.mxu0 0.0
    %1311 = vmatprep.subr.mxu0 0.0
    %1312 = vmatpush1.msra.mxu0 0.0
    %1313 = vmatprep.subr.mxu0 0.0
    %1314 = vmatpush1.msra.mxu0 0.0
    %1315 = vmatprep.subr.mxu0 0.0
    %1316 = vmatpush1.msra.mxu0 0.0
    %1317 = vmatprep.subr.mxu0 0.0
    %1318 = vmatpush1.msra.mxu0 0.0
    %1319 = vmatprep.subr.mxu0 0.0
    %1320 = vmatpush1.msra.mxu0 0.0
    %1321 = vmatprep.subr.mxu0 0.0
    %1322 = vmatpush1.msra.mxu0 0.0
    %1323 = vmatprep.subr.mxu0 0.0
    %1324 = vmatpush1.msra.mxu0 0.0
    %1325 = vmatprep.subr.mxu0 0.0
    %1326 = vmatpush1.msra.mxu0 0.0
    %1327 = vmatprep.subr.mxu0 0.0
    %1328 = vmatpush1.msra.mxu0 0.0
    %1329 = vmatprep.subr.mxu0 0.0
    %1330 = vmatpush1.msra.mxu0 0.0
    %1331 = vmatprep.subr.mxu0 0.0
    %1332 = vmatpush1.msra.mxu0 0.0
    %1333 = vmatprep.subr.mxu0 0.0
    %1334 = vmatpush1.msra.mxu0 0.0
    %1335 = vmatprep.subr.mxu0 0.0
    %1336 = vmatpush1.msra.mxu0 0.0
    %1337 = vmatprep.subr.mxu0 0.0
    %1338 = vmatpush1.msra.mxu0 0.0
    %1339 = vmatprep.subr.mxu0 0.0
    %1340 = vmatpush1.msra.mxu0 0.0
    %1341 = vmatprep.subr.mxu0 0.0
    %1342 = vmatpush1.msra.mxu0 0.0
    %1343 = vmatprep.subr.mxu0 0.0
    %1344 = vmatpush1.msra.mxu0 0.0
    %1345 = vmatprep.subr.mxu0 0.0
    %1346 = vmatpush1.msra.mxu0 0.0
    %1347 = vmatprep.subr.mxu0 0.0
    %1348 = vmatpush1.msra.mxu0 0.0
    %1349 = vmatprep.subr.mxu0 0.0
    %1350 = vmatpush1.msra.mxu0 0.0
    %1351 = vmatprep.subr.mxu0 0.0
    %1352 = vmatpush1.msra.mxu0 0.0
    %1353 = vmatprep.subr.mxu0 0.0
    %1354 = vmatpush1.msra.mxu0 0.0
    %1355 = vmatprep.subr.mxu0 0.0
    %1356 = vmatpush1.msra.mxu0 0.0
    %1357 = vmatprep.subr.mxu0 0.0
    %1358 = vmatpush1.msra.mxu0 0.0
    %1359 = vmatprep.mubr.f32.mxu0 0.0
    %1360 = vmatmul.mubr.f32.gmra.mrb[0].mxu0 %v1201
    %v1361 = vpop.f32.mrb[0].mxu0
    %v1362 = vadd.f32 0.0, %v1361
    %v1363 = vpop.f32.mrb[0].mxu0
    %v1364 = vadd.f32 0.0, %v1363
    %1365 = vmatprep.mubr.f32.mxu0 0.0
    %1366 = vmatmul.mubr.f32.gmra.mrb[0].mxu0 %v1204
    %v1367 = vpop.f32.mrb[0].mxu0
    %v1368 = vadd.f32 0.0, %v1367
    %v1369 = vpop.f32.mrb[0].mxu0
    %v1370 = vadd.f32 0.0, %v1369
    %1371 = vdwg.mxu0
    %v1372 = vadd.f32 %v1111, %v1285
    %v1373 = vadd.f32 %v1113, %v1287
    %v1374 = vadd.f32 %v1188, %v1362
    %v1375 = vadd.f32 %v1190, %v1364
    %v1376 = vadd.f32 %v1117, %v1291
    %v1377 = vadd.f32 %v1119, %v1293
    %v1378 = vadd.f32 %v1194, %v1368
    %v1379 = vadd.f32 %v1196, %v1370
    %v1380 = vld [vmem:[%s6] sm:$0xff]
    %v1381 = vld [vmem:[%s6 + $0x8] sm:$0xff]
    %v1383 = vsel %vm852, %v1380, 0
    %v1386 = vsel %vm852, %v1381, 0
    %v1389 = vsel %vm859, %v844, 0
    %v1392 = vsel %vm859, %v845, 0
    %v1395 = vsel %vm859, %v846, 0
    %v1398 = vsel %vm859, %v847, 0
    %1400 = vmatprep.subr.mxu0 %v1392
    %1401 = vmatpush1.msra.mxu0 %v1389
    %1402 = vmatprep.subr.mxu0 0.0
    %1403 = vmatpush1.msra.mxu0 0.0
    %1404 = vmatprep.subr.mxu0 0.0
    %1405 = vmatpush1.msra.mxu0 0.0
    %1406 = vmatprep.subr.mxu0 0.0
    %1407 = vmatpush1.msra.mxu0 0.0
    %1408 = vmatprep.subr.mxu0 0.0
    %1409 = vmatpush1.msra.mxu0 0.0
    %1410 = vmatprep.subr.mxu0 0.0
    %1411 = vmatpush1.msra.mxu0 0.0
    %1412 = vmatprep.subr.mxu0 0.0
    %1413 = vmatpush1.msra.mxu0 0.0
    %1414 = vmatprep.subr.mxu0 0.0
    %1415 = vmatpush1.msra.mxu0 0.0
    %1416 = vmatprep.subr.mxu0 0.0
    %1417 = vmatpush1.msra.mxu0 0.0
    %1418 = vmatprep.subr.mxu0 0.0
    %1419 = vmatpush1.msra.mxu0 0.0
    %1420 = vmatprep.subr.mxu0 0.0
    %1421 = vmatpush1.msra.mxu0 0.0
    %1422 = vmatprep.subr.mxu0 0.0
    %1423 = vmatpush1.msra.mxu0 0.0
    %1424 = vmatprep.subr.mxu0 0.0
    %1425 = vmatpush1.msra.mxu0 0.0
    %1426 = vmatprep.subr.mxu0 0.0
    %1427 = vmatpush1.msra.mxu0 0.0
    %1428 = vmatprep.subr.mxu0 0.0
    %1429 = vmatpush1.msra.mxu0 0.0
    %1430 = vmatprep.subr.mxu0 0.0
    %1431 = vmatpush1.msra.mxu0 0.0
    %1432 = vmatprep.subr.mxu0 0.0
    %1433 = vmatpush1.msra.mxu0 0.0
    %1434 = vmatprep.subr.mxu0 0.0
    %1435 = vmatpush1.msra.mxu0 0.0
    %1436 = vmatprep.subr.mxu0 0.0
    %1437 = vmatpush1.msra.mxu0 0.0
    %1438 = vmatprep.subr.mxu0 0.0
    %1439 = vmatpush1.msra.mxu0 0.0
    %1440 = vmatprep.subr.mxu0 0.0
    %1441 = vmatpush1.msra.mxu0 0.0
    %1442 = vmatprep.subr.mxu0 0.0
    %1443 = vmatpush1.msra.mxu0 0.0
    %1444 = vmatprep.subr.mxu0 0.0
    %1445 = vmatpush1.msra.mxu0 0.0
    %1446 = vmatprep.subr.mxu0 0.0
    %1447 = vmatpush1.msra.mxu0 0.0
    %1448 = vmatprep.subr.mxu0 0.0
    %1449 = vmatpush1.msra.mxu0 0.0
    %1450 = vmatprep.subr.mxu0 0.0
    %1451 = vmatpush1.msra.mxu0 0.0
    %1452 = vmatprep.subr.mxu0 0.0
    %1453 = vmatpush1.msra.mxu0 0.0
    %1454 = vmatprep.subr.mxu0 0.0
    %1455 = vmatpush1.msra.mxu0 0.0
    %1456 = vmatprep.subr.mxu0 0.0
    %1457 = vmatpush1.msra.mxu0 0.0
    %1458 = vmatprep.subr.mxu0 0.0
    %1459 = vmatpush1.msra.mxu0 0.0
    %1460 = vmatprep.subr.mxu0 0.0
    %1461 = vmatpush1.msra.mxu0 0.0
    %1462 = vmatprep.subr.mxu0 0.0
    %1463 = vmatpush1.msra.mxu0 0.0
    %1464 = vmatprep.mubr.f32.mxu0 0.0
    %1465 = vmatmul.mubr.f32.gmra.mrb[0].mxu0 %v1383
    %v1466 = vpop.f32.mrb[0].mxu0
    %v1467 = vadd.f32 0.0, %v1466
    %v1468 = vpop.f32.mrb[0].mxu0
    %v1469 = vadd.f32 0.0, %v1468
    %1470 = vmatprep.mubr.f32.mxu0 0.0
    %1471 = vmatmul.mubr.f32.gmra.mrb[0].mxu0 %v1386
    %v1472 = vpop.f32.mrb[0].mxu0
    %v1473 = vadd.f32 0.0, %v1472
    %v1474 = vpop.f32.mrb[0].mxu0
    %v1475 = vadd.f32 0.0, %v1474
    %1476 = vdwg.mxu0
    %1477 = vmatprep.subr.mxu0 %v1398
    %1478 = vmatpush1.msra.mxu0 %v1395
    %1479 = vmatprep.subr.mxu0 0.0
    %1480 = vmatpush1.msra.mxu0 0.0
    %1481 = vmatprep.subr.mxu0 0.0
    %1482 = vmatpush1.msra.mxu0 0.0
    %1483 = vmatprep.subr.mxu0 0.0
    %1484 = vmatpush1.msra.mxu0 0.0
    %1485 = vmatprep.subr.mxu0 0.0
    %1486 = vmatpush1.msra.mxu0 0.0
    %1487 = vmatprep.subr.mxu0 0.0
    %1488 = vmatpush1.msra.mxu0 0.0
    %1489 = vmatprep.subr.mxu0 0.0
    %1490 = vmatpush1.msra.mxu0 0.0
    %1491 = vmatprep.subr.mxu0 0.0
    %1492 = vmatpush1.msra.mxu0 0.0
    %1493 = vmatprep.subr.mxu0 0.0
    %1494 = vmatpush1.msra.mxu0 0.0
    %1495 = vmatprep.subr.mxu0 0.0
    %1496 = vmatpush1.msra.mxu0 0.0
    %1497 = vmatprep.subr.mxu0 0.0
    %1498 = vmatpush1.msra.mxu0 0.0
    %1499 = vmatprep.subr.mxu0 0.0
    %1500 = vmatpush1.msra.mxu0 0.0
    %1501 = vmatprep.subr.mxu0 0.0
    %1502 = vmatpush1.msra.mxu0 0.0
    %1503 = vmatprep.subr.mxu0 0.0
    %1504 = vmatpush1.msra.mxu0 0.0
    %1505 = vmatprep.subr.mxu0 0.0
    %1506 = vmatpush1.msra.mxu0 0.0
    %1507 = vmatprep.subr.mxu0 0.0
    %1508 = vmatpush1.msra.mxu0 0.0
    %1509 = vmatprep.subr.mxu0 0.0
    %1510 = vmatpush1.msra.mxu0 0.0
    %1511 = vmatprep.subr.mxu0 0.0
    %1512 = vmatpush1.msra.mxu0 0.0
    %1513 = vmatprep.subr.mxu0 0.0
    %1514 = vmatpush1.msra.mxu0 0.0
    %1515 = vmatprep.subr.mxu0 0.0
    %1516 = vmatpush1.msra.mxu0 0.0
    %1517 = vmatprep.subr.mxu0 0.0
    %1518 = vmatpush1.msra.mxu0 0.0
    %1519 = vmatprep.subr.mxu0 0.0
    %1520 = vmatpush1.msra.mxu0 0.0
    %1521 = vmatprep.subr.mxu0 0.0
    %1522 = vmatpush1.msra.mxu0 0.0
    %1523 = vmatprep.subr.mxu0 0.0
    %1524 = vmatpush1.msra.mxu0 0.0
    %1525 = vmatprep.subr.mxu0 0.0
    %1526 = vmatpush1.msra.mxu0 0.0
    %1527 = vmatprep.subr.mxu0 0.0
    %1528 = vmatpush1.msra.mxu0 0.0
    %1529 = vmatprep.subr.mxu0 0.0
    %1530 = vmatpush1.msra.mxu0 0.0
    %1531 = vmatprep.subr.mxu0 0.0
    %1532 = vmatpush1.msra.mxu0 0.0
    %1533 = vmatprep.subr.mxu0 0.0
    %1534 = vmatpush1.msra.mxu0 0.0
    %1535 = vmatprep.subr.mxu0 0.0
    %1536 = vmatpush1.msra.mxu0 0.0
    %1537 = vmatprep.subr.mxu0 0.0
    %1538 = vmatpush1.msra.mxu0 0.0
    %1539 = vmatprep.subr.mxu0 0.0
    %1540 = vmatpush1.msra.mxu0 0.0
    %1541 = vmatprep.mubr.f32.mxu0 0.0
    %1542 = vmatmul.mubr.f32.gmra.mrb[0].mxu0 %v1383
    %v1543 = vpop.f32.mrb[0].mxu0
    %v1544 = vadd.f32 0.0, %v1543
    %v1545 = vpop.f32.mrb[0].mxu0
    %v1546 = vadd.f32 0.0, %v1545
    %1547 = vmatprep.mubr.f32.mxu0 0.0
    %1548 = vmatmul.mubr.f32.gmra.mrb[0].mxu0 %v1386
    %v1549 = vpop.f32.mrb[0].mxu0
    %v1550 = vadd.f32 0.0, %v1549
    %v1551 = vpop.f32.mrb[0].mxu0
    %v1552 = vadd.f32 0.0, %v1551
    %1553 = vdwg.mxu0
    %v1554 = vadd.f32 %v1372, %v1467
    %v1555 = vadd.f32 %v1373, %v1469
    %v1556 = vadd.f32 %v1374, %v1544
    %v1557 = vadd.f32 %v1375, %v1546
    %v1558 = vadd.f32 %v1376, %v1473
    %v1559 = vadd.f32 %v1377, %v1475
    %v1560 = vadd.f32 %v1378, %v1550
    %v1561 = vadd.f32 %v1379, %v1552
    %v1562 = vld [vmem:[%s7] sm:$0xff]
    %v1563 = vld [vmem:[%s7 + $0x8] sm:$0xff]
    %1565 = vset.pattern.permute.xlu0 0
    %1566 = vperm.xlu0 %1565, %v1562
    %v1567 = vpop.permute.xlu0 %1566
    %1570 = vset.pattern.permute.xlu0 0
    %1571 = vperm.xlu0 %1570, %v1563
    %v1572 = vpop.permute.xlu0 %1571
    %v1574 = vadd.f32 %v1554, %v1567
    %v1575 = vadd.f32 %v1555, %v1567
    %v1576 = vadd.f32 %v1556, %v1567
    %v1577 = vadd.f32 %v1557, %v1567
    %v1578 = vadd.f32 %v1558, %v1572
    %v1579 = vadd.f32 %v1559, %v1572
    %v1580 = vadd.f32 %v1560, %v1572
    %v1581 = vadd.f32 %v1561, %v1572
    %v1582 = vsub.f32 0.0, %v1574
    %v1583 = vsub.f32 0.0, %v1575
    %v1584 = vsub.f32 0.0, %v1576
    %v1585 = vsub.f32 0.0, %v1577
    %v1586 = vsub.f32 0.0, %v1578
    %v1587 = vsub.f32 0.0, %v1579
    %v1588 = vsub.f32 0.0, %v1580
    %v1589 = vsub.f32 0.0, %v1581
    %v1590 = vmul.f32 %v1582, 1.442695
    %v1591 = vpow.pop %v1590
    %v1592 = vmul.f32 %v1583, 1.442695
    %v1593 = vpow.pop %v1592
    %v1594 = vmul.f32 %v1584, 1.442695
    %v1595 = vpow.pop %v1594
    %v1596 = vmul.f32 %v1585, 1.442695
    %v1597 = vpow.pop %v1596
    %v1598 = vmul.f32 %v1586, 1.442695
    %v1599 = vpow.pop %v1598
    %v1600 = vmul.f32 %v1587, 1.442695
    %v1601 = vpow.pop %v1600
    %v1602 = vmul.f32 %v1588, 1.442695
    %v1603 = vpow.pop %v1602
    %v1604 = vmul.f32 %v1589, 1.442695
    %v1605 = vpow.pop %v1604
    %v1606 = vadd.f32 %v1591, 1.0
    %v1607 = vadd.f32 %v1593, 1.0
    %v1608 = vadd.f32 %v1595, 1.0
    %v1609 = vadd.f32 %v1597, 1.0
    %v1610 = vadd.f32 %v1599, 1.0
    %v1611 = vadd.f32 %v1601, 1.0
    %v1612 = vadd.f32 %v1603, 1.0
    %v1613 = vadd.f32 %v1605, 1.0
    %v1614 = vrcp.pop %v1606
    %v1615 = vmul.f32 1.0, %v1614
    %v1616 = vrcp.pop %v1607
    %v1617 = vmul.f32 1.0, %v1616
    %v1618 = vrcp.pop %v1608
    %v1619 = vmul.f32 1.0, %v1618
    %v1620 = vrcp.pop %v1609
    %v1621 = vmul.f32 1.0, %v1620
    %v1622 = vrcp.pop %v1610
    %v1623 = vmul.f32 1.0, %v1622
    %v1624 = vrcp.pop %v1611
    %v1625 = vmul.f32 1.0, %v1624
    %v1626 = vrcp.pop %v1612
    %v1627 = vmul.f32 1.0, %v1626
    %v1628 = vrcp.pop %v1613
    %v1629 = vmul.f32 1.0, %v1628
    %v1630 = vmul.f32 %v1574, %v1615
    %v1631 = vmul.f32 %v1575, %v1617
    %v1632 = vmul.f32 %v1576, %v1619
    %v1633 = vmul.f32 %v1577, %v1621
    %v1634 = vmul.f32 %v1578, %v1623
    %v1635 = vmul.f32 %v1579, %v1625
    %v1636 = vmul.f32 %v1580, %v1627
    %v1637 = vmul.f32 %v1581, %v1629
    %1638 = vst [vmem:[#allocation2] sm:$0xff] %v1630
    %1639 = vst [vmem:[#allocation2 + $0x8] sm:$0xff] %v1631
    %1640 = vst [vmem:[#allocation2 + $0x10] sm:$0xff] %v1632
    %1641 = vst [vmem:[#allocation2 + $0x18] sm:$0xff] %v1633
    %1642 = vst [vmem:[#allocation2 + $0x20] sm:$0xff] %v1634
    %1643 = vst [vmem:[#allocation2 + $0x28] sm:$0xff] %v1635
    %1644 = vst [vmem:[#allocation2 + $0x30] sm:$0xff] %v1636
    %1645 = vst [vmem:[#allocation2 + $0x38] sm:$0xff] %v1637
    // Predicated region
    $region34: #{tpu_custom_call.1} parent=1 // pred_check
      _
    $region35: #{tpu_custom_call.1} parent=1 // pred_check_branch
      %1647 = sbr.rel (0) target = $region37
    $region36: #{tpu_custom_call.1} parent=1 // pred_region
      %s1649 = ssub.s32 1024, 1024
      %1650 = vsyncadd [#allocation3], %s1649
      %s1651 = sshll.u32 [#allocation2], 4
      %s1652 = int_to_ptr.vmem [resolvable:$true] %s1651
      %1657 = dma.vmem_to_hbm [thread:$0]  %s1652, 1024, %s8, [#allocation3], 512, 512, 32
    $region37: #{tpu_custom_call.1} parent=1 // pred_fallthru
      _
    // Predicated region
    $region38: #{tpu_custom_call.1} parent=1 // pred_check
      _
    $region39: #{tpu_custom_call.1} parent=1 // pred_check_branch
      %1659 = sbr.rel (0) target = $region41
    $region40: #{tpu_custom_call.1} parent=1 // pred_region
      %1660 = dma.done [#allocation3], 1024
    $region41: #{tpu_custom_call.1} parent=1 // pred_fallthru
      _
    %1661 = vsyncpa [#allocation3], 1

</llo_original>
